<compile_context>
chip_gen: v7x
topology: tpu7x:2x2x1
jax: 0.10.0
libtpu: 0.0.40
codegen_flags: <defaults>
</compile_context>

<pallas_src>
import functools

import jax
import jax.numpy as jnp
from jax.experimental import pallas as pl
from jax.experimental.pallas import tpu as pltpu


# ------------------------------ fused Pallas kernel ------------------------------

def _fused_kernel(x_ref, w1_ref, b1_ref, w2_ref, b2_ref, feat_ref,
                  *, H, W, CIN, C1, C2):
    """One batch image per grid step, channels-major (C, H*W) layout.

    x_ref:   (1, CIN, H*W)   channels on sublanes, pixels dense in lanes
    w1_ref:  (9, C1, CIN)    tap-major conv1 weights, tap t = kh*3 + kw, (Cout, Cin)
    b1_ref:  (C1, 1)
    w2_ref:  (9, C2, C1)
    b2_ref:  (C2, 1)
    feat_ref:(1, C2, 1)      pooled 'relu2' features for this image
    """
    HW = H * W

    # Pixel-coordinate boundary masks for the 8 non-center taps (shared by both convs).
    pix = jax.lax.broadcasted_iota(jnp.int32, (1, HW), 1)
    if (W & (W - 1)) == 0:                      # W power of two -> shift/and (always lowers)
        row = jnp.right_shift(pix, W.bit_length() - 1)
        col = jnp.bitwise_and(pix, W - 1)
    else:
        row = pix // W
        col = pix % W
    masks = {}
    for dh in (-1, 0, 1):
        for dw in (-1, 0, 1):
            conds = []
            if dh == -1:
                conds.append(row >= 1)
            elif dh == 1:
                conds.append(row <= H - 2)
            if dw == -1:
                conds.append(col >= 1)
            elif dw == 1:
                conds.append(col <= W - 2)
            if conds:
                m = conds[0]
                for c in conds[1:]:
                    m = jnp.logical_and(m, c)
                masks[(dh, dw)] = m             # (1, HW) bool

    def conv3x3_relu(act, w_ref, b_ref, cout):
        # act: (Cin, HW)  ->  relu(conv3x3(act) + b): (Cout, HW)
        # Accumulator is (Cout, HW) f32 = 2-4 dense vregs; 9 shifted MXU dots.
        acc = jnp.zeros((cout, HW), jnp.float32)
        for t in range(9):                      # 3x3 conv taps, t = kh*3 + kw
            dh, dw = t // 3 - 1, t % 3 - 1
            off = dh * W + dw
            if off == 0:
                shifted = act
            else:
                # shifted[p] = act[p + off] (lane rotate on the XLU, wrap-around is
                # zeroed by the boundary mask -> implements zero padding).
                shifted = pltpu.roll(act, (-off) % HW, axis=1)
            m = masks.get((dh, dw))
            patch = shifted if m is None else jnp.where(m, shifted, 0.0)
            acc = acc + jnp.dot(w_ref[t], patch,
                                preferred_element_type=jnp.float32)
        return jnp.maximum(acc + b_ref[...], 0.0)          # bias + ReLU fused, f32

    x = x_ref[0]                                           # (CIN, HW)
    a1 = conv3x3_relu(x, w1_ref, b1_ref, C1)               # conv1 + relu1  (C1, HW)
    a2 = conv3x3_relu(a1, w2_ref, b2_ref, C2)              # conv2 + relu2  (C2, HW)

    # extracted layer 'relu2': adaptive_avg_pool2d(x, (1,1)) == spatial mean over lanes
    feat_ref[...] = jnp.mean(a2, axis=1, keepdims=True)[None]   # (1, C2, 1)

    # NOTE: the submodule's 'fc' would run next on the flattened pooled activation, but
    # FeatureExtractor discards its result ('fc' not in extracted_layers), so the dead
    # matmul is intentionally omitted (perf review item 5).


# --------------------------------- wrapper ---------------------------------------

_LAYER_ORDER = ("conv1", "relu1", "conv2", "relu2", "fc")
# TODO(synk): generic dispatch over an arbitrary submodule._modules dict (and the
# 'AuxLogits' skip) has no Pallas equivalent; the fixed synthetic submodule above is
# unrolled and fused into a single kernel, specialized to extracted_layers=('relu2',).


@functools.partial(jax.jit, static_argnames=("extracted_layers",))
def feature_extractor_forward(x_nchw, params, extracted_layers):
    """Mirrors FeatureExtractor.forward for the synthetic submodule (fused kernel)."""
    assert tuple(extracted_layers) == ("relu2",), "fused kernel is specialized to relu2"

    N, CIN, H, W = x_nchw.shape
    C1 = params["conv1_w"].shape[-1]
    C2 = params["conv2_w"].shape[-1]
    HW = H * W

    # Layout prep is free / byte-scale: NCHW -> (N, CIN, H*W) collapses contiguous
    # minor dims (bitcast reshape, no device copy); weight transposes touch < 5 KB.
    x = x_nchw.reshape(N, CIN, HW).astype(jnp.float32)
    w1 = jnp.transpose(params["conv1_w"], (0, 1, 3, 2)).reshape(9, C1, CIN).astype(jnp.float32)
    w2 = jnp.transpose(params["conv2_w"], (0, 1, 3, 2)).reshape(9, C2, C1).astype(jnp.float32)
    b1 = params["conv1_b"].reshape(C1, 1).astype(jnp.float32)
    b2 = params["conv2_b"].reshape(C2, 1).astype(jnp.float32)

    kern = functools.partial(_fused_kernel, H=H, W=W, CIN=CIN, C1=C1, C2=C2)
    feat = pl.pallas_call(
        kern,
        out_shape=jax.ShapeDtypeStruct((N, C2, 1), jnp.float32),
        grid=(N,),                                      # one image per step (2 TCs on v7x)
        in_specs=[
            pl.BlockSpec((1, CIN, HW), lambda n: (n, 0, 0)),
            pl.BlockSpec((9, C1, CIN), lambda n: (0, 0, 0)),
            pl.BlockSpec((C1, 1), lambda n: (0, 0)),
            pl.BlockSpec((9, C2, C1), lambda n: (0, 0, 0)),
            pl.BlockSpec((C2, 1), lambda n: (0, 0)),
        ],
        out_specs=pl.BlockSpec((1, C2, 1), lambda n: (n, 0, 0)),
        compiler_params=pltpu.CompilerParams(
            dimension_semantics=("parallel",)),
    )(x, w1, b1, w2, b2)

    # PyTorch: x is replaced by the pooled tensor; only extracted features are returned.
    return [feat.reshape(N, C2, 1, 1)]                  # (N, C2, 1, 1), matching PyTorch


# ------------------------------ pure-JAX reference -------------------------------

def reference_forward(x_nchw, params, extracted_layers):
    x = x_nchw.astype(jnp.float32)
    outs = []
    for name in _LAYER_ORDER:
        if name == "fc":
            x = x.reshape(x.shape[0], -1)
            x = x @ params["fc_w"] + params["fc_b"]
        elif name.startswith("conv"):
            w_oihw = jnp.transpose(params[name + "_w"], (3, 2, 0, 1))
            x = jax.lax.conv_general_dilated(
                x, w_oihw, window_strides=(1, 1), padding=((1, 1), (1, 1)),
                dimension_numbers=("NCHW", "OIHW", "NCHW"))
            x = x + params[name + "_b"][None, :, None, None]
        else:
            x = jnp.maximum(x, 0.0)
        if name in extracted_layers:
            x = jnp.mean(x, axis=(2, 3), keepdims=True)
            outs.append(x)
    return outs


# --------------------------------------- main -------------------------------------

if __name__ == "__main__":
    N, CIN, H, W = 2, 4, 16, 16
    C1, C2, NUM_CLASSES = 8, 16, 10

    key = jax.random.PRNGKey(0)
    kx, k1, k2, k3, k4, k5, k6 = jax.random.split(key, 7)

    x = jax.random.normal(kx, (N, CIN, H, W), jnp.float32)   # PyTorch NCHW input

    params = {
        # conv weights stored as (kh, kw, Cin, Cout) = HWIO
        "conv1_w": jax.random.normal(k1, (3, 3, CIN, C1), jnp.float32) * 0.1,
        "conv1_b": jax.random.normal(k2, (C1,), jnp.float32) * 0.1,
        "conv2_w": jax.random.normal(k3, (3, 3, C1, C2), jnp.float32) * 0.1,
        "conv2_b": jax.random.normal(k4, (C2,), jnp.float32) * 0.1,
        # fc weight stored as (in, out) = PyTorch Linear weight transposed
        # (the fc output is discarded by FeatureExtractor, so the kernel skips it)
        "fc_w": jax.random.normal(k5, (C2, NUM_CLASSES), jnp.float32) * 0.1,
        "fc_b": jax.random.normal(k6, (NUM_CLASSES,), jnp.float32) * 0.1,
    }

    extracted_layers = ("relu2",)

    outs = feature_extractor_forward(x, params, extracted_layers)
    outs = [jax.block_until_ready(o) for o in outs]

    refs = reference_forward(x, params, extracted_layers)
    assert len(outs) == len(refs)
    for o, r in zip(outs, refs):
        assert o.shape == r.shape, (o.shape, r.shape)
        assert jnp.allclose(o, r, atol=1e-4, rtol=1e-4), \
            float(jnp.max(jnp.abs(o - r)))

    print("KERNEL_OK")
</pallas_src>

<mosaic_0001>
module attributes {stable_mosaic.version = 11 : i64} {
  func.func @_fused_kernel(%arg0: i32, %arg1: memref<1x4x256xf32, #tpu.memory_space<vmem>>, %arg2: memref<9x8x4xf32, #tpu.memory_space<vmem>>, %arg3: memref<8x1xf32, #tpu.memory_space<vmem>>, %arg4: memref<9x16x8xf32, #tpu.memory_space<vmem>>, %arg5: memref<16x1xf32, #tpu.memory_space<vmem>>, %arg6: memref<1x16x1xf32, #tpu.memory_space<vmem>>) attributes {dimension_semantics = [#tpu.dimension_semantics<parallel>], iteration_bounds = array<i64: 2>, scalar_prefetch = 0 : i64, scratch_operands = 0 : i64, tpu.core_type = #tpu.core_type<tc>, window_params = [{transform_indices = @transform_0, window_bounds = array<i64: 1, 4, 256>}, {pipeline_mode = #tpu.pipeline_mode<synchronous>, transform_indices = @transform_1, window_bounds = array<i64: 9, 8, 4>}, {pipeline_mode = #tpu.pipeline_mode<synchronous>, transform_indices = @transform_2, window_bounds = array<i64: 8, 1>}, {pipeline_mode = #tpu.pipeline_mode<synchronous>, transform_indices = @transform_3, window_bounds = array<i64: 9, 16, 8>}, {pipeline_mode = #tpu.pipeline_mode<synchronous>, transform_indices = @transform_4, window_bounds = array<i64: 16, 1>}, {transform_indices = @transform_5, window_bounds = array<i64: 1, 16, 1>}]} {
    %0 = tpu.iota {dimensions = array<i32: 1>} : vector<1x256xi32>
    %c4_i32 = arith.constant 4 : i32
    %1 = vector.broadcast %c4_i32 : i32 to vector<1x256xi32>
    %2 = arith.shrsi %0, %1 : vector<1x256xi32>
    %c15_i32 = arith.constant 15 : i32
    %3 = vector.broadcast %c15_i32 : i32 to vector<1x256xi32>
    %4 = arith.andi %0, %3 : vector<1x256xi32>
    %c1_i32 = arith.constant 1 : i32
    %5 = vector.broadcast %c1_i32 : i32 to vector<1x256xi32>
    %6 = arith.cmpi sge, %2, %5 : vector<1x256xi32>
    %c1_i32_0 = arith.constant 1 : i32
    %7 = vector.broadcast %c1_i32_0 : i32 to vector<1x256xi32>
    %8 = arith.cmpi sge, %4, %7 : vector<1x256xi32>
    %9 = arith.andi %6, %8 : vector<1x256xi1>
    %c1_i32_1 = arith.constant 1 : i32
    %10 = vector.broadcast %c1_i32_1 : i32 to vector<1x256xi32>
    %11 = arith.cmpi sge, %2, %10 : vector<1x256xi32>
    %c1_i32_2 = arith.constant 1 : i32
    %12 = vector.broadcast %c1_i32_2 : i32 to vector<1x256xi32>
    %13 = arith.cmpi sge, %2, %12 : vector<1x256xi32>
    %c14_i32 = arith.constant 14 : i32
    %14 = vector.broadcast %c14_i32 : i32 to vector<1x256xi32>
    %15 = arith.cmpi sle, %4, %14 : vector<1x256xi32>
    %16 = arith.andi %13, %15 : vector<1x256xi1>
    %c1_i32_3 = arith.constant 1 : i32
    %17 = vector.broadcast %c1_i32_3 : i32 to vector<1x256xi32>
    %18 = arith.cmpi sge, %4, %17 : vector<1x256xi32>
    %c14_i32_4 = arith.constant 14 : i32
    %19 = vector.broadcast %c14_i32_4 : i32 to vector<1x256xi32>
    %20 = arith.cmpi sle, %4, %19 : vector<1x256xi32>
    %c14_i32_5 = arith.constant 14 : i32
    %21 = vector.broadcast %c14_i32_5 : i32 to vector<1x256xi32>
    %22 = arith.cmpi sle, %2, %21 : vector<1x256xi32>
    %c1_i32_6 = arith.constant 1 : i32
    %23 = vector.broadcast %c1_i32_6 : i32 to vector<1x256xi32>
    %24 = arith.cmpi sge, %4, %23 : vector<1x256xi32>
    %25 = arith.andi %22, %24 : vector<1x256xi1>
    %c14_i32_7 = arith.constant 14 : i32
    %26 = vector.broadcast %c14_i32_7 : i32 to vector<1x256xi32>
    %27 = arith.cmpi sle, %2, %26 : vector<1x256xi32>
    %c14_i32_8 = arith.constant 14 : i32
    %28 = vector.broadcast %c14_i32_8 : i32 to vector<1x256xi32>
    %29 = arith.cmpi sle, %2, %28 : vector<1x256xi32>
    %c14_i32_9 = arith.constant 14 : i32
    %30 = vector.broadcast %c14_i32_9 : i32 to vector<1x256xi32>
    %31 = arith.cmpi sle, %4, %30 : vector<1x256xi32>
    %32 = arith.andi %29, %31 : vector<1x256xi1>
    %c0 = arith.constant 0 : index
    %c0_10 = arith.constant 0 : index
    %c0_11 = arith.constant 0 : index
    %33 = vector.load %arg1[%c0, %c0_10, %c0_11] : memref<1x4x256xf32, #tpu.memory_space<vmem>>, vector<1x4x256xf32>
    %34 = vector.shape_cast %33 : vector<1x4x256xf32> to vector<4x256xf32>
    %cst = arith.constant 0.000000e+00 : f32
    %35 = vector.broadcast %cst : f32 to vector<8x256xf32>
    %c17_i32 = arith.constant 17 : i32
    %36 = tpu.dynamic_rotate %34 by %c17_i32 dim 1 : vector<4x256xf32>, i32 -> vector<4x256xf32>
    %cst_12 = arith.constant 0.000000e+00 : f32
    %37 = vector.shape_cast %9 : vector<1x256xi1> to vector<1x256xi1>
    %38 = vector.broadcast %37 : vector<1x256xi1> to vector<4x256xi1>
    %39 = vector.broadcast %cst_12 : f32 to vector<4x256xf32>
    %40 = arith.select %38, %36, %39 : vector<4x256xi1>, vector<4x256xf32>
    %c0_13 = arith.constant 0 : index
    %c0_14 = arith.constant 0 : index
    %c0_15 = arith.constant 0 : index
    %41 = vector.load %arg2[%c0_13, %c0_14, %c0_15] : memref<9x8x4xf32, #tpu.memory_space<vmem>>, vector<1x8x4xf32>
    %42 = vector.shape_cast %41 : vector<1x8x4xf32> to vector<8x4xf32>
    %cst_16 = arith.constant dense<0.000000e+00> : vector<8x256xf32>
    %43 = tpu.matmul %42, %40, %cst_16 {dimension_numbers = #tpu.dot_dimension_numbers<[1], [0], [0], [1], [0, 0, 1, 1], [], []>} : vector<8x4xf32>, vector<4x256xf32>, vector<8x256xf32> -> vector<8x256xf32>
    %44 = arith.addf %35, %43 : vector<8x256xf32>
    %c16_i32 = arith.constant 16 : i32
    %45 = tpu.dynamic_rotate %34 by %c16_i32 dim 1 : vector<4x256xf32>, i32 -> vector<4x256xf32>
    %cst_17 = arith.constant 0.000000e+00 : f32
    %46 = vector.shape_cast %11 : vector<1x256xi1> to vector<1x256xi1>
    %47 = vector.broadcast %46 : vector<1x256xi1> to vector<4x256xi1>
    %48 = vector.broadcast %cst_17 : f32 to vector<4x256xf32>
    %49 = arith.select %47, %45, %48 : vector<4x256xi1>, vector<4x256xf32>
    %c1 = arith.constant 1 : index
    %c0_18 = arith.constant 0 : index
    %c0_19 = arith.constant 0 : index
    %50 = vector.load %arg2[%c1, %c0_18, %c0_19] : memref<9x8x4xf32, #tpu.memory_space<vmem>>, vector<1x8x4xf32>
    %51 = vector.shape_cast %50 : vector<1x8x4xf32> to vector<8x4xf32>
    %cst_20 = arith.constant dense<0.000000e+00> : vector<8x256xf32>
    %52 = tpu.matmul %51, %49, %cst_20 {dimension_numbers = #tpu.dot_dimension_numbers<[1], [0], [0], [1], [0, 0, 1, 1], [], []>} : vector<8x4xf32>, vector<4x256xf32>, vector<8x256xf32> -> vector<8x256xf32>
    %53 = arith.addf %44, %52 : vector<8x256xf32>
    %c15_i32_21 = arith.constant 15 : i32
    %54 = tpu.dynamic_rotate %34 by %c15_i32_21 dim 1 : vector<4x256xf32>, i32 -> vector<4x256xf32>
    %cst_22 = arith.constant 0.000000e+00 : f32
    %55 = vector.shape_cast %16 : vector<1x256xi1> to vector<1x256xi1>
    %56 = vector.broadcast %55 : vector<1x256xi1> to vector<4x256xi1>
    %57 = vector.broadcast %cst_22 : f32 to vector<4x256xf32>
    %58 = arith.select %56, %54, %57 : vector<4x256xi1>, vector<4x256xf32>
    %c2 = arith.constant 2 : index
    %c0_23 = arith.constant 0 : index
    %c0_24 = arith.constant 0 : index
    %59 = vector.load %arg2[%c2, %c0_23, %c0_24] : memref<9x8x4xf32, #tpu.memory_space<vmem>>, vector<1x8x4xf32>
    %60 = vector.shape_cast %59 : vector<1x8x4xf32> to vector<8x4xf32>
    %cst_25 = arith.constant dense<0.000000e+00> : vector<8x256xf32>
    %61 = tpu.matmul %60, %58, %cst_25 {dimension_numbers = #tpu.dot_dimension_numbers<[1], [0], [0], [1], [0, 0, 1, 1], [], []>} : vector<8x4xf32>, vector<4x256xf32>, vector<8x256xf32> -> vector<8x256xf32>
    %62 = arith.addf %53, %61 : vector<8x256xf32>
    %c1_i32_26 = arith.constant 1 : i32
    %63 = tpu.dynamic_rotate %34 by %c1_i32_26 dim 1 : vector<4x256xf32>, i32 -> vector<4x256xf32>
    %cst_27 = arith.constant 0.000000e+00 : f32
    %64 = vector.shape_cast %18 : vector<1x256xi1> to vector<1x256xi1>
    %65 = vector.broadcast %64 : vector<1x256xi1> to vector<4x256xi1>
    %66 = vector.broadcast %cst_27 : f32 to vector<4x256xf32>
    %67 = arith.select %65, %63, %66 : vector<4x256xi1>, vector<4x256xf32>
    %c3 = arith.constant 3 : index
    %c0_28 = arith.constant 0 : index
    %c0_29 = arith.constant 0 : index
    %68 = vector.load %arg2[%c3, %c0_28, %c0_29] : memref<9x8x4xf32, #tpu.memory_space<vmem>>, vector<1x8x4xf32>
    %69 = vector.shape_cast %68 : vector<1x8x4xf32> to vector<8x4xf32>
    %cst_30 = arith.constant dense<0.000000e+00> : vector<8x256xf32>
    %70 = tpu.matmul %69, %67, %cst_30 {dimension_numbers = #tpu.dot_dimension_numbers<[1], [0], [0], [1], [0, 0, 1, 1], [], []>} : vector<8x4xf32>, vector<4x256xf32>, vector<8x256xf32> -> vector<8x256xf32>
    %71 = arith.addf %62, %70 : vector<8x256xf32>
    %c4 = arith.constant 4 : index
    %c0_31 = arith.constant 0 : index
    %c0_32 = arith.constant 0 : index
    %72 = vector.load %arg2[%c4, %c0_31, %c0_32] : memref<9x8x4xf32, #tpu.memory_space<vmem>>, vector<1x8x4xf32>
    %73 = vector.shape_cast %72 : vector<1x8x4xf32> to vector<8x4xf32>
    %cst_33 = arith.constant dense<0.000000e+00> : vector<8x256xf32>
    %74 = tpu.matmul %73, %34, %cst_33 {dimension_numbers = #tpu.dot_dimension_numbers<[1], [0], [0], [1], [0, 0, 1, 1], [], []>} : vector<8x4xf32>, vector<4x256xf32>, vector<8x256xf32> -> vector<8x256xf32>
    %75 = arith.addf %71, %74 : vector<8x256xf32>
    %c255_i32 = arith.constant 255 : i32
    %76 = tpu.dynamic_rotate %34 by %c255_i32 dim 1 : vector<4x256xf32>, i32 -> vector<4x256xf32>
    %cst_34 = arith.constant 0.000000e+00 : f32
    %77 = vector.shape_cast %20 : vector<1x256xi1> to vector<1x256xi1>
    %78 = vector.broadcast %77 : vector<1x256xi1> to vector<4x256xi1>
    %79 = vector.broadcast %cst_34 : f32 to vector<4x256xf32>
    %80 = arith.select %78, %76, %79 : vector<4x256xi1>, vector<4x256xf32>
    %c5 = arith.constant 5 : index
    %c0_35 = arith.constant 0 : index
    %c0_36 = arith.constant 0 : index
    %81 = vector.load %arg2[%c5, %c0_35, %c0_36] : memref<9x8x4xf32, #tpu.memory_space<vmem>>, vector<1x8x4xf32>
    %82 = vector.shape_cast %81 : vector<1x8x4xf32> to vector<8x4xf32>
    %cst_37 = arith.constant dense<0.000000e+00> : vector<8x256xf32>
    %83 = tpu.matmul %82, %80, %cst_37 {dimension_numbers = #tpu.dot_dimension_numbers<[1], [0], [0], [1], [0, 0, 1, 1], [], []>} : vector<8x4xf32>, vector<4x256xf32>, vector<8x256xf32> -> vector<8x256xf32>
    %84 = arith.addf %75, %83 : vector<8x256xf32>
    %c241_i32 = arith.constant 241 : i32
    %85 = tpu.dynamic_rotate %34 by %c241_i32 dim 1 : vector<4x256xf32>, i32 -> vector<4x256xf32>
    %cst_38 = arith.constant 0.000000e+00 : f32
    %86 = vector.shape_cast %25 : vector<1x256xi1> to vector<1x256xi1>
    %87 = vector.broadcast %86 : vector<1x256xi1> to vector<4x256xi1>
    %88 = vector.broadcast %cst_38 : f32 to vector<4x256xf32>
    %89 = arith.select %87, %85, %88 : vector<4x256xi1>, vector<4x256xf32>
    %c6 = arith.constant 6 : index
    %c0_39 = arith.constant 0 : index
    %c0_40 = arith.constant 0 : index
    %90 = vector.load %arg2[%c6, %c0_39, %c0_40] : memref<9x8x4xf32, #tpu.memory_space<vmem>>, vector<1x8x4xf32>
    %91 = vector.shape_cast %90 : vector<1x8x4xf32> to vector<8x4xf32>
    %cst_41 = arith.constant dense<0.000000e+00> : vector<8x256xf32>
    %92 = tpu.matmul %91, %89, %cst_41 {dimension_numbers = #tpu.dot_dimension_numbers<[1], [0], [0], [1], [0, 0, 1, 1], [], []>} : vector<8x4xf32>, vector<4x256xf32>, vector<8x256xf32> -> vector<8x256xf32>
    %93 = arith.addf %84, %92 : vector<8x256xf32>
    %c240_i32 = arith.constant 240 : i32
    %94 = tpu.dynamic_rotate %34 by %c240_i32 dim 1 : vector<4x256xf32>, i32 -> vector<4x256xf32>
    %cst_42 = arith.constant 0.000000e+00 : f32
    %95 = vector.shape_cast %27 : vector<1x256xi1> to vector<1x256xi1>
    %96 = vector.broadcast %95 : vector<1x256xi1> to vector<4x256xi1>
    %97 = vector.broadcast %cst_42 : f32 to vector<4x256xf32>
    %98 = arith.select %96, %94, %97 : vector<4x256xi1>, vector<4x256xf32>
    %c7 = arith.constant 7 : index
    %c0_43 = arith.constant 0 : index
    %c0_44 = arith.constant 0 : index
    %99 = vector.load %arg2[%c7, %c0_43, %c0_44] : memref<9x8x4xf32, #tpu.memory_space<vmem>>, vector<1x8x4xf32>
    %100 = vector.shape_cast %99 : vector<1x8x4xf32> to vector<8x4xf32>
    %cst_45 = arith.constant dense<0.000000e+00> : vector<8x256xf32>
    %101 = tpu.matmul %100, %98, %cst_45 {dimension_numbers = #tpu.dot_dimension_numbers<[1], [0], [0], [1], [0, 0, 1, 1], [], []>} : vector<8x4xf32>, vector<4x256xf32>, vector<8x256xf32> -> vector<8x256xf32>
    %102 = arith.addf %93, %101 : vector<8x256xf32>
    %c239_i32 = arith.constant 239 : i32
    %103 = tpu.dynamic_rotate %34 by %c239_i32 dim 1 : vector<4x256xf32>, i32 -> vector<4x256xf32>
    %cst_46 = arith.constant 0.000000e+00 : f32
    %104 = vector.shape_cast %32 : vector<1x256xi1> to vector<1x256xi1>
    %105 = vector.broadcast %104 : vector<1x256xi1> to vector<4x256xi1>
    %106 = vector.broadcast %cst_46 : f32 to vector<4x256xf32>
    %107 = arith.select %105, %103, %106 : vector<4x256xi1>, vector<4x256xf32>
    %c8 = arith.constant 8 : index
    %c0_47 = arith.constant 0 : index
    %c0_48 = arith.constant 0 : index
    %108 = vector.load %arg2[%c8, %c0_47, %c0_48] : memref<9x8x4xf32, #tpu.memory_space<vmem>>, vector<1x8x4xf32>
    %109 = vector.shape_cast %108 : vector<1x8x4xf32> to vector<8x4xf32>
    %cst_49 = arith.constant dense<0.000000e+00> : vector<8x256xf32>
    %110 = tpu.matmul %109, %107, %cst_49 {dimension_numbers = #tpu.dot_dimension_numbers<[1], [0], [0], [1], [0, 0, 1, 1], [], []>} : vector<8x4xf32>, vector<4x256xf32>, vector<8x256xf32> -> vector<8x256xf32>
    %111 = arith.addf %102, %110 : vector<8x256xf32>
    %c0_50 = arith.constant 0 : index
    %c0_51 = arith.constant 0 : index
    %112 = vector.load %arg3[%c0_50, %c0_51] : memref<8x1xf32, #tpu.memory_space<vmem>>, vector<8x1xf32>
    %113 = vector.broadcast %112 : vector<8x1xf32> to vector<8x256xf32>
    %114 = arith.addf %111, %113 : vector<8x256xf32>
    %cst_52 = arith.constant 0.000000e+00 : f32
    %115 = vector.broadcast %cst_52 : f32 to vector<8x256xf32>
    %116 = arith.maximumf %114, %115 : vector<8x256xf32>
    %cst_53 = arith.constant 0.000000e+00 : f32
    %117 = vector.broadcast %cst_53 : f32 to vector<16x256xf32>
    %c17_i32_54 = arith.constant 17 : i32
    %118 = tpu.dynamic_rotate %116 by %c17_i32_54 dim 1 : vector<8x256xf32>, i32 -> vector<8x256xf32>
    %cst_55 = arith.constant 0.000000e+00 : f32
    %119 = vector.shape_cast %9 : vector<1x256xi1> to vector<1x256xi1>
    %120 = vector.broadcast %119 : vector<1x256xi1> to vector<8x256xi1>
    %121 = vector.broadcast %cst_55 : f32 to vector<8x256xf32>
    %122 = arith.select %120, %118, %121 : vector<8x256xi1>, vector<8x256xf32>
    %c0_56 = arith.constant 0 : index
    %c0_57 = arith.constant 0 : index
    %c0_58 = arith.constant 0 : index
    %123 = vector.load %arg4[%c0_56, %c0_57, %c0_58] : memref<9x16x8xf32, #tpu.memory_space<vmem>>, vector<1x16x8xf32>
    %124 = vector.shape_cast %123 : vector<1x16x8xf32> to vector<16x8xf32>
    %cst_59 = arith.constant dense<0.000000e+00> : vector<16x256xf32>
    %125 = tpu.matmul %124, %122, %cst_59 {dimension_numbers = #tpu.dot_dimension_numbers<[1], [0], [0], [1], [0, 0, 1, 1], [], []>} : vector<16x8xf32>, vector<8x256xf32>, vector<16x256xf32> -> vector<16x256xf32>
    %126 = arith.addf %117, %125 : vector<16x256xf32>
    %c16_i32_60 = arith.constant 16 : i32
    %127 = tpu.dynamic_rotate %116 by %c16_i32_60 dim 1 : vector<8x256xf32>, i32 -> vector<8x256xf32>
    %cst_61 = arith.constant 0.000000e+00 : f32
    %128 = vector.shape_cast %11 : vector<1x256xi1> to vector<1x256xi1>
    %129 = vector.broadcast %128 : vector<1x256xi1> to vector<8x256xi1>
    %130 = vector.broadcast %cst_61 : f32 to vector<8x256xf32>
    %131 = arith.select %129, %127, %130 : vector<8x256xi1>, vector<8x256xf32>
    %c1_62 = arith.constant 1 : index
    %c0_63 = arith.constant 0 : index
    %c0_64 = arith.constant 0 : index
    %132 = vector.load %arg4[%c1_62, %c0_63, %c0_64] : memref<9x16x8xf32, #tpu.memory_space<vmem>>, vector<1x16x8xf32>
    %133 = vector.shape_cast %132 : vector<1x16x8xf32> to vector<16x8xf32>
    %cst_65 = arith.constant dense<0.000000e+00> : vector<16x256xf32>
    %134 = tpu.matmul %133, %131, %cst_65 {dimension_numbers = #tpu.dot_dimension_numbers<[1], [0], [0], [1], [0, 0, 1, 1], [], []>} : vector<16x8xf32>, vector<8x256xf32>, vector<16x256xf32> -> vector<16x256xf32>
    %135 = arith.addf %126, %134 : vector<16x256xf32>
    %c15_i32_66 = arith.constant 15 : i32
    %136 = tpu.dynamic_rotate %116 by %c15_i32_66 dim 1 : vector<8x256xf32>, i32 -> vector<8x256xf32>
    %cst_67 = arith.constant 0.000000e+00 : f32
    %137 = vector.shape_cast %16 : vector<1x256xi1> to vector<1x256xi1>
    %138 = vector.broadcast %137 : vector<1x256xi1> to vector<8x256xi1>
    %139 = vector.broadcast %cst_67 : f32 to vector<8x256xf32>
    %140 = arith.select %138, %136, %139 : vector<8x256xi1>, vector<8x256xf32>
    %c2_68 = arith.constant 2 : index
    %c0_69 = arith.constant 0 : index
    %c0_70 = arith.constant 0 : index
    %141 = vector.load %arg4[%c2_68, %c0_69, %c0_70] : memref<9x16x8xf32, #tpu.memory_space<vmem>>, vector<1x16x8xf32>
    %142 = vector.shape_cast %141 : vector<1x16x8xf32> to vector<16x8xf32>
    %cst_71 = arith.constant dense<0.000000e+00> : vector<16x256xf32>
    %143 = tpu.matmul %142, %140, %cst_71 {dimension_numbers = #tpu.dot_dimension_numbers<[1], [0], [0], [1], [0, 0, 1, 1], [], []>} : vector<16x8xf32>, vector<8x256xf32>, vector<16x256xf32> -> vector<16x256xf32>
    %144 = arith.addf %135, %143 : vector<16x256xf32>
    %c1_i32_72 = arith.constant 1 : i32
    %145 = tpu.dynamic_rotate %116 by %c1_i32_72 dim 1 : vector<8x256xf32>, i32 -> vector<8x256xf32>
    %cst_73 = arith.constant 0.000000e+00 : f32
    %146 = vector.shape_cast %18 : vector<1x256xi1> to vector<1x256xi1>
    %147 = vector.broadcast %146 : vector<1x256xi1> to vector<8x256xi1>
    %148 = vector.broadcast %cst_73 : f32 to vector<8x256xf32>
    %149 = arith.select %147, %145, %148 : vector<8x256xi1>, vector<8x256xf32>
    %c3_74 = arith.constant 3 : index
    %c0_75 = arith.constant 0 : index
    %c0_76 = arith.constant 0 : index
    %150 = vector.load %arg4[%c3_74, %c0_75, %c0_76] : memref<9x16x8xf32, #tpu.memory_space<vmem>>, vector<1x16x8xf32>
    %151 = vector.shape_cast %150 : vector<1x16x8xf32> to vector<16x8xf32>
    %cst_77 = arith.constant dense<0.000000e+00> : vector<16x256xf32>
    %152 = tpu.matmul %151, %149, %cst_77 {dimension_numbers = #tpu.dot_dimension_numbers<[1], [0], [0], [1], [0, 0, 1, 1], [], []>} : vector<16x8xf32>, vector<8x256xf32>, vector<16x256xf32> -> vector<16x256xf32>
    %153 = arith.addf %144, %152 : vector<16x256xf32>
    %c4_78 = arith.constant 4 : index
    %c0_79 = arith.constant 0 : index
    %c0_80 = arith.constant 0 : index
    %154 = vector.load %arg4[%c4_78, %c0_79, %c0_80] : memref<9x16x8xf32, #tpu.memory_space<vmem>>, vector<1x16x8xf32>
    %155 = vector.shape_cast %154 : vector<1x16x8xf32> to vector<16x8xf32>
    %cst_81 = arith.constant dense<0.000000e+00> : vector<16x256xf32>
    %156 = tpu.matmul %155, %116, %cst_81 {dimension_numbers = #tpu.dot_dimension_numbers<[1], [0], [0], [1], [0, 0, 1, 1], [], []>} : vector<16x8xf32>, vector<8x256xf32>, vector<16x256xf32> -> vector<16x256xf32>
    %157 = arith.addf %153, %156 : vector<16x256xf32>
    %c255_i32_82 = arith.constant 255 : i32
    %158 = tpu.dynamic_rotate %116 by %c255_i32_82 dim 1 : vector<8x256xf32>, i32 -> vector<8x256xf32>
    %cst_83 = arith.constant 0.000000e+00 : f32
    %159 = vector.shape_cast %20 : vector<1x256xi1> to vector<1x256xi1>
    %160 = vector.broadcast %159 : vector<1x256xi1> to vector<8x256xi1>
    %161 = vector.broadcast %cst_83 : f32 to vector<8x256xf32>
    %162 = arith.select %160, %158, %161 : vector<8x256xi1>, vector<8x256xf32>
    %c5_84 = arith.constant 5 : index
    %c0_85 = arith.constant 0 : index
    %c0_86 = arith.constant 0 : index
    %163 = vector.load %arg4[%c5_84, %c0_85, %c0_86] : memref<9x16x8xf32, #tpu.memory_space<vmem>>, vector<1x16x8xf32>
    %164 = vector.shape_cast %163 : vector<1x16x8xf32> to vector<16x8xf32>
    %cst_87 = arith.constant dense<0.000000e+00> : vector<16x256xf32>
    %165 = tpu.matmul %164, %162, %cst_87 {dimension_numbers = #tpu.dot_dimension_numbers<[1], [0], [0], [1], [0, 0, 1, 1], [], []>} : vector<16x8xf32>, vector<8x256xf32>, vector<16x256xf32> -> vector<16x256xf32>
    %166 = arith.addf %157, %165 : vector<16x256xf32>
    %c241_i32_88 = arith.constant 241 : i32
    %167 = tpu.dynamic_rotate %116 by %c241_i32_88 dim 1 : vector<8x256xf32>, i32 -> vector<8x256xf32>
    %cst_89 = arith.constant 0.000000e+00 : f32
    %168 = vector.shape_cast %25 : vector<1x256xi1> to vector<1x256xi1>
    %169 = vector.broadcast %168 : vector<1x256xi1> to vector<8x256xi1>
    %170 = vector.broadcast %cst_89 : f32 to vector<8x256xf32>
    %171 = arith.select %169, %167, %170 : vector<8x256xi1>, vector<8x256xf32>
    %c6_90 = arith.constant 6 : index
    %c0_91 = arith.constant 0 : index
    %c0_92 = arith.constant 0 : index
    %172 = vector.load %arg4[%c6_90, %c0_91, %c0_92] : memref<9x16x8xf32, #tpu.memory_space<vmem>>, vector<1x16x8xf32>
    %173 = vector.shape_cast %172 : vector<1x16x8xf32> to vector<16x8xf32>
    %cst_93 = arith.constant dense<0.000000e+00> : vector<16x256xf32>
    %174 = tpu.matmul %173, %171, %cst_93 {dimension_numbers = #tpu.dot_dimension_numbers<[1], [0], [0], [1], [0, 0, 1, 1], [], []>} : vector<16x8xf32>, vector<8x256xf32>, vector<16x256xf32> -> vector<16x256xf32>
    %175 = arith.addf %166, %174 : vector<16x256xf32>
    %c240_i32_94 = arith.constant 240 : i32
    %176 = tpu.dynamic_rotate %116 by %c240_i32_94 dim 1 : vector<8x256xf32>, i32 -> vector<8x256xf32>
    %cst_95 = arith.constant 0.000000e+00 : f32
    %177 = vector.shape_cast %27 : vector<1x256xi1> to vector<1x256xi1>
    %178 = vector.broadcast %177 : vector<1x256xi1> to vector<8x256xi1>
    %179 = vector.broadcast %cst_95 : f32 to vector<8x256xf32>
    %180 = arith.select %178, %176, %179 : vector<8x256xi1>, vector<8x256xf32>
    %c7_96 = arith.constant 7 : index
    %c0_97 = arith.constant 0 : index
    %c0_98 = arith.constant 0 : index
    %181 = vector.load %arg4[%c7_96, %c0_97, %c0_98] : memref<9x16x8xf32, #tpu.memory_space<vmem>>, vector<1x16x8xf32>
    %182 = vector.shape_cast %181 : vector<1x16x8xf32> to vector<16x8xf32>
    %cst_99 = arith.constant dense<0.000000e+00> : vector<16x256xf32>
    %183 = tpu.matmul %182, %180, %cst_99 {dimension_numbers = #tpu.dot_dimension_numbers<[1], [0], [0], [1], [0, 0, 1, 1], [], []>} : vector<16x8xf32>, vector<8x256xf32>, vector<16x256xf32> -> vector<16x256xf32>
    %184 = arith.addf %175, %183 : vector<16x256xf32>
    %c239_i32_100 = arith.constant 239 : i32
    %185 = tpu.dynamic_rotate %116 by %c239_i32_100 dim 1 : vector<8x256xf32>, i32 -> vector<8x256xf32>
    %cst_101 = arith.constant 0.000000e+00 : f32
    %186 = vector.shape_cast %32 : vector<1x256xi1> to vector<1x256xi1>
    %187 = vector.broadcast %186 : vector<1x256xi1> to vector<8x256xi1>
    %188 = vector.broadcast %cst_101 : f32 to vector<8x256xf32>
    %189 = arith.select %187, %185, %188 : vector<8x256xi1>, vector<8x256xf32>
    %c8_102 = arith.constant 8 : index
    %c0_103 = arith.constant 0 : index
    %c0_104 = arith.constant 0 : index
    %190 = vector.load %arg4[%c8_102, %c0_103, %c0_104] : memref<9x16x8xf32, #tpu.memory_space<vmem>>, vector<1x16x8xf32>
    %191 = vector.shape_cast %190 : vector<1x16x8xf32> to vector<16x8xf32>
    %cst_105 = arith.constant dense<0.000000e+00> : vector<16x256xf32>
    %192 = tpu.matmul %191, %189, %cst_105 {dimension_numbers = #tpu.dot_dimension_numbers<[1], [0], [0], [1], [0, 0, 1, 1], [], []>} : vector<16x8xf32>, vector<8x256xf32>, vector<16x256xf32> -> vector<16x256xf32>
    %193 = arith.addf %184, %192 : vector<16x256xf32>
    %c0_106 = arith.constant 0 : index
    %c0_107 = arith.constant 0 : index
    %194 = vector.load %arg5[%c0_106, %c0_107] : memref<16x1xf32, #tpu.memory_space<vmem>>, vector<16x1xf32>
    %195 = vector.broadcast %194 : vector<16x1xf32> to vector<16x256xf32>
    %196 = arith.addf %193, %195 : vector<16x256xf32>
    %cst_108 = arith.constant 0.000000e+00 : f32
    %197 = vector.broadcast %cst_108 : f32 to vector<16x256xf32>
    %198 = arith.maximumf %196, %197 : vector<16x256xf32>
    %cst_109 = arith.constant dense<0.000000e+00> : vector<16xf32>
    %199 = vector.multi_reduction <add>, %198, %cst_109 [1] : vector<16x256xf32> to vector<16xf32>
    %200 = vector.shape_cast %199 : vector<16xf32> to vector<16x1xf32>
    %cst_110 = arith.constant 2.560000e+02 : f32
    %201 = vector.broadcast %cst_110 : f32 to vector<16x1xf32>
    %202 = arith.divf %200, %201 : vector<16x1xf32>
    %203 = vector.shape_cast %202 : vector<16x1xf32> to vector<1x16x1xf32>
    %c0_111 = arith.constant 0 : index
    %c0_112 = arith.constant 0 : index
    %c0_113 = arith.constant 0 : index
    %204 = vector.load %arg6[%c0_111, %c0_112, %c0_113] : memref<1x16x1xf32, #tpu.memory_space<vmem>>, vector<1x16x1xf32>
    tpu.vector_store %arg6[%c0_111, %c0_112, %c0_113], %203 {strides = array<i32>} : memref<1x16x1xf32, #tpu.memory_space<vmem>>, vector<1x16x1xf32>,
    return
  }
  func.func @transform_0(%arg0: i32) -> (i32, i32, i32) {
    %c0_i32 = arith.constant 0 : i32
    %c0_i32_0 = arith.constant 0 : i32
    %c0_i32_1 = arith.constant 0 : i32
    return %arg0, %c0_i32, %c0_i32_0 : i32, i32, i32
  }
  func.func @transform_1(%arg0: i32) -> (i32, i32, i32) {
    %c0_i32 = arith.constant 0 : i32
    %c0_i32_0 = arith.constant 0 : i32
    %c0_i32_1 = arith.constant 0 : i32
    %c0_i32_2 = arith.constant 0 : i32
    return %c0_i32, %c0_i32_0, %c0_i32_1 : i32, i32, i32
  }
  func.func @transform_2(%arg0: i32) -> (i32, i32) {
    %c0_i32 = arith.constant 0 : i32
    %c0_i32_0 = arith.constant 0 : i32
    %c0_i32_1 = arith.constant 0 : i32
    return %c0_i32, %c0_i32_0 : i32, i32
  }
  func.func @transform_3(%arg0: i32) -> (i32, i32, i32) {
    %c0_i32 = arith.constant 0 : i32
    %c0_i32_0 = arith.constant 0 : i32
    %c0_i32_1 = arith.constant 0 : i32
    %c0_i32_2 = arith.constant 0 : i32
    return %c0_i32, %c0_i32_0, %c0_i32_1 : i32, i32, i32
  }
  func.func @transform_4(%arg0: i32) -> (i32, i32) {
    %c0_i32 = arith.constant 0 : i32
    %c0_i32_0 = arith.constant 0 : i32
    %c0_i32_1 = arith.constant 0 : i32
    return %c0_i32, %c0_i32_0 : i32, i32
  }
  func.func @transform_5(%arg0: i32) -> (i32, i32, i32) {
    %c0_i32 = arith.constant 0 : i32
    %c0_i32_0 = arith.constant 0 : i32
    %c0_i32_1 = arith.constant 0 : i32
    return %arg0, %c0_i32, %c0_i32_0 : i32, i32, i32
  }
}

</mosaic_0001>

<llo_original>
// kernel: feature_extractor_forward.1
$region0: #{feature_extractor_forward.1}
  #allocation0 [shape = 'u32[]', space=smem, size = 0x4, offset = 0x4, fixed_abs, tag = 'smem constant byte address 0x4 - core index']
  #allocation1 [shape = 'u32[144,128]{1,0:T(1,128)}', space=vmem, size = 0x12000, scoped, tag = 'internal scratch']
  %s0 = inlined_call_operand.vmem [shape: f32[2,4,256], index: 0, kind: input, shape index: {}]
  %s1 = inlined_call_operand.vmem [shape: f32[9,8,4], index: 1, kind: input, shape index: {}]
  %s2 = inlined_call_operand.vmem [shape: f32[8,1], index: 2, kind: input, shape index: {}]
  %s3 = inlined_call_operand.vmem [shape: f32[9,16,8], index: 3, kind: input, shape index: {}]
  %s4 = inlined_call_operand.vmem [shape: f32[16,1], index: 4, kind: input, shape index: {}]
  %s5 = inlined_call_operand.vmem [shape: f32[2,16,1], index: 5, kind: output, shape index: {}]
  %s6 = sld [smem:[#allocation0]]
  $region53: #{feature_extractor_forward.1} parent=0
    _
  %s8 = ssub.s32 1, %s6
  %s9 = scalar_select 0, %s8, %s6
  loop: start=0, step=1, limit=4
  $region2: #{feature_extractor_forward.1} parent=0 // loop_pre_header
    _
  $region3: #{feature_extractor_forward.1} parent=0 // loop_header
    %s11 = sphi 0, %s15
    %p12 = scmp.ge.s32.totalorder %s11, 4
    %s21 = sphi 0, %s23
    %s24 = sphi 0, %s21
    %s25 = sphi 0, %s24
    %s41 = sphi 0, %s25
    %s45 = sphi 0, %s45
    %s47 = sphi 0, %s45
    %s48 = sphi 0, %s47
    %s62 = sphi 0, %s48
    %s66 = sphi 0, %s66
    %s68 = sphi 0, %s66
    %s69 = sphi 0, %s68
    %s83 = sphi 0, %s69
    %s87 = sphi 0, %s87
    %s89 = sphi 0, %s87
    %s90 = sphi 0, %s89
    %s104 = sphi 0, %s90
    %s108 = sphi 0, %s108
    %s110 = sphi 0, %s108
    %s111 = sphi 0, %s110
    %s125 = sphi 0, %s111
    %s131 = sphi 0, %s133
    %s134 = sphi 0, %s131
    %s135 = sphi 0, %s134
    %s151 = sphi 0, %s135
  $region4: #{feature_extractor_forward.1} parent=0 // loop_header_branch
    %14 = sbr.rel (%p12) target = $region8
  $region5: #{feature_extractor_forward.1} parent=0 // loop_body
    %s16 = ssub.s32 %s11, 1
    %s17 = ssub.s32 %s11, 2
    %s18 = sadd.s32 %s11, 1
    %s19 = ssub.s32 %s11, %s18
    %p20 = scmp.eq.s32.totalorder %s19, 0
    %s22 = sadd.s32 %s21, 1
    %s23 = scalar_select %p20, %s21, %s22
    %p26 = pneg %p20
    %p27 = scmp.eq.s32.totalorder %s11, 1
    %p28 = por %p26, %p27
    %p29 = scmp.ne.s32.totalorder %s21, %s24
    %p30 = scmp.eq.s32.totalorder %s11, 0
    %p31 = por %p29, %p30
    %p32 = scmp.ne.s32.totalorder %s21, %s24
    %p33 = scmp.eq.s32.totalorder %s16, 1
    %p34 = por %p32, %p33
    %p35 = scmp.ne.s32.totalorder %s24, %s25
    %p36 = scmp.eq.s32.totalorder %s16, 0
    %p37 = por %p35, %p36
    %p38 = scmp.ne.s32.totalorder %s24, %s25
    %p39 = scmp.eq.s32.totalorder %s17, 1
    %p40 = por %p38, %p39
    %p42 = scmp.ne.s32.totalorder %s25, %s41
    %p43 = scmp.eq.s32.totalorder %s17, 0
    %p44 = por %p42, %p43
    %s46 = sadd.s32 %s45, 1
    %p49 = scmp.eq.s32.totalorder %s11, 1
    %p50 = scmp.ne.s32.totalorder %s45, %s47
    %p51 = scmp.eq.s32.totalorder %s11, 0
    %p52 = por %p50, %p51
    %p53 = scmp.ne.s32.totalorder %s45, %s47
    %p54 = scmp.eq.s32.totalorder %s16, 1
    %p55 = por %p53, %p54
    %p56 = scmp.ne.s32.totalorder %s47, %s48
    %p57 = scmp.eq.s32.totalorder %s16, 0
    %p58 = por %p56, %p57
    %p59 = scmp.ne.s32.totalorder %s47, %s48
    %p60 = scmp.eq.s32.totalorder %s17, 1
    %p61 = por %p59, %p60
    %p63 = scmp.ne.s32.totalorder %s48, %s62
    %p64 = scmp.eq.s32.totalorder %s17, 0
    %p65 = por %p63, %p64
    %s67 = sadd.s32 %s66, 1
    %p70 = scmp.eq.s32.totalorder %s11, 1
    %p71 = scmp.ne.s32.totalorder %s66, %s68
    %p72 = scmp.eq.s32.totalorder %s11, 0
    %p73 = por %p71, %p72
    %p74 = scmp.ne.s32.totalorder %s66, %s68
    %p75 = scmp.eq.s32.totalorder %s16, 1
    %p76 = por %p74, %p75
    %p77 = scmp.ne.s32.totalorder %s68, %s69
    %p78 = scmp.eq.s32.totalorder %s16, 0
    %p79 = por %p77, %p78
    %p80 = scmp.ne.s32.totalorder %s68, %s69
    %p81 = scmp.eq.s32.totalorder %s17, 1
    %p82 = por %p80, %p81
    %p84 = scmp.ne.s32.totalorder %s69, %s83
    %p85 = scmp.eq.s32.totalorder %s17, 0
    %p86 = por %p84, %p85
    %s88 = sadd.s32 %s87, 1
    %p91 = scmp.eq.s32.totalorder %s11, 1
    %p92 = scmp.ne.s32.totalorder %s87, %s89
    %p93 = scmp.eq.s32.totalorder %s11, 0
    %p94 = por %p92, %p93
    %p95 = scmp.ne.s32.totalorder %s87, %s89
    %p96 = scmp.eq.s32.totalorder %s16, 1
    %p97 = por %p95, %p96
    %p98 = scmp.ne.s32.totalorder %s89, %s90
    %p99 = scmp.eq.s32.totalorder %s16, 0
    %p100 = por %p98, %p99
    %p101 = scmp.ne.s32.totalorder %s89, %s90
    %p102 = scmp.eq.s32.totalorder %s17, 1
    %p103 = por %p101, %p102
    %p105 = scmp.ne.s32.totalorder %s90, %s104
    %p106 = scmp.eq.s32.totalorder %s17, 0
    %p107 = por %p105, %p106
    %s109 = sadd.s32 %s108, 1
    %p112 = scmp.eq.s32.totalorder %s11, 1
    %p113 = scmp.ne.s32.totalorder %s108, %s110
    %p114 = scmp.eq.s32.totalorder %s11, 0
    %p115 = por %p113, %p114
    %p116 = scmp.ne.s32.totalorder %s108, %s110
    %p117 = scmp.eq.s32.totalorder %s16, 1
    %p118 = por %p116, %p117
    %p119 = scmp.ne.s32.totalorder %s110, %s111
    %p120 = scmp.eq.s32.totalorder %s16, 0
    %p121 = por %p119, %p120
    %p122 = scmp.ne.s32.totalorder %s110, %s111
    %p123 = scmp.eq.s32.totalorder %s17, 1
    %p124 = por %p122, %p123
    %p126 = scmp.ne.s32.totalorder %s111, %s125
    %p127 = scmp.eq.s32.totalorder %s17, 0
    %p128 = por %p126, %p127
    %s129 = ssub.s32 %s11, %s18
    %p130 = scmp.eq.s32.totalorder %s129, 0
    %s132 = sadd.s32 %s131, 1
    %s133 = scalar_select %p130, %s131, %s132
    %p136 = pneg %p130
    %p137 = scmp.eq.s32.totalorder %s11, 1
    %p138 = por %p136, %p137
    %p139 = scmp.ne.s32.totalorder %s131, %s134
    %p140 = scmp.eq.s32.totalorder %s11, 0
    %p141 = por %p139, %p140
    %p142 = scmp.ne.s32.totalorder %s131, %s134
    %p143 = scmp.eq.s32.totalorder %s16, 1
    %p144 = por %p142, %p143
    %p145 = scmp.ne.s32.totalorder %s134, %s135
    %p146 = scmp.eq.s32.totalorder %s16, 0
    %p147 = por %p145, %p146
    %p148 = scmp.ne.s32.totalorder %s134, %s135
    %p149 = scmp.eq.s32.totalorder %s17, 1
    %p150 = por %p148, %p149
    %p152 = scmp.ne.s32.totalorder %s135, %s151
    %p153 = scmp.eq.s32.totalorder %s17, 0
    %p154 = por %p152, %p153
    %p155 = scmp.le.s32.totalorder 1, %s11
    %p156 = scmp.lt.s32.totalorder %s11, 3
    %p157 = pnand %p155, %p156
    %p158 = pneg %p157
    // Predicated region
    $region9: #{feature_extractor_forward.1} parent=5 // pred_check
      _
    $region10: #{feature_extractor_forward.1} parent=5 // pred_check_branch
      %160 = sbr.rel (%p157) target = $region12
    $region11: #{feature_extractor_forward.1} parent=5 // pred_region
      %s161 = ssub.s32 %s11, 1
      // Predicated region
      $region13: #{feature_extractor_forward.1} parent=11 // pred_check
        %p162 = pneg %p58
      $region14: #{feature_extractor_forward.1} parent=11 // pred_check_branch
        %164 = sbr.rel (%p162) target = $region16
      $region15: #{feature_extractor_forward.1} parent=11 // pred_region
        _
      $region16: #{feature_extractor_forward.1} parent=11 // pred_fallthru
        _
      // Predicated region
      $region17: #{feature_extractor_forward.1} parent=11 // pred_check
        %p165 = pneg %p79
      $region18: #{feature_extractor_forward.1} parent=11 // pred_check_branch
        %167 = sbr.rel (%p165) target = $region20
      $region19: #{feature_extractor_forward.1} parent=11 // pred_region
        _
      $region20: #{feature_extractor_forward.1} parent=11 // pred_fallthru
        _
      // Predicated region
      $region21: #{feature_extractor_forward.1} parent=11 // pred_check
        %p168 = pneg %p100
      $region22: #{feature_extractor_forward.1} parent=11 // pred_check_branch
        %170 = sbr.rel (%p168) target = $region24
      $region23: #{feature_extractor_forward.1} parent=11 // pred_region
        _
      $region24: #{feature_extractor_forward.1} parent=11 // pred_fallthru
        _
      // Predicated region
      $region25: #{feature_extractor_forward.1} parent=11 // pred_check
        %p171 = pneg %p121
      $region26: #{feature_extractor_forward.1} parent=11 // pred_check_branch
        %173 = sbr.rel (%p171) target = $region28
      $region27: #{feature_extractor_forward.1} parent=11 // pred_region
        _
      $region28: #{feature_extractor_forward.1} parent=11 // pred_fallthru
        _
    $region12: #{feature_extractor_forward.1} parent=5 // pred_fallthru
      _
    %p174 = scmp.lt.s32.totalorder %s11, 2
    // Predicated region
    $region29: #{feature_extractor_forward.1} parent=5 // pred_check
      %p175 = pneg %p174
    $region30: #{feature_extractor_forward.1} parent=5 // pred_check_branch
      %177 = sbr.rel (%p175) target = $region32
    $region31: #{feature_extractor_forward.1} parent=5 // pred_region
      // Predicated region
      $region33: #{feature_extractor_forward.1} parent=31 // pred_check
        %p178 = pneg %p31
      $region34: #{feature_extractor_forward.1} parent=31 // pred_check_branch
        %180 = sbr.rel (%p178) target = $region36
      $region35: #{feature_extractor_forward.1} parent=31 // pred_region
        %p181 = scmp.lt.s32.totalorder %s11, 1
        %s182 = scalar_select %p181, %s11, 1
        %s183 = smul.addr %s182, 2
        %s184 = smul.addr %s183, 4
        %s185 = scalar_lea.vmem %s0, %s184
      $region36: #{feature_extractor_forward.1} parent=31 // pred_fallthru
        _
    $region32: #{feature_extractor_forward.1} parent=5 // pred_fallthru
      _
    %p186 = scmp.le.s32.totalorder 1, %s11
    %p187 = scmp.lt.s32.totalorder %s11, 3
    %p188 = pnand %p186, %p187
    %p189 = pneg %p188
    // Predicated region
    $region37: #{feature_extractor_forward.1} parent=5 // pred_check
      _
    $region38: #{feature_extractor_forward.1} parent=5 // pred_check_branch
      %191 = sbr.rel (%p188) target = $region40
    $region39: #{feature_extractor_forward.1} parent=5 // pred_region
      %s192 = ssub.s32 %s11, 1
      %p193 = scmp.lt.s32.totalorder %s16, 1
      %s194 = scalar_select %p193, %s16, 1
      %s195 = smul.addr %s194, 2
      %s196 = smul.addr %s195, 4
      %s197 = scalar_lea.vmem %s0, %s196
      %p198 = pneg %p37
      %p199 = pneg %p34
      %p200 = pneg %p58
      %p201 = pneg %p55
      %p202 = pneg %p79
      %p203 = pneg %p76
      %p204 = pneg %p100
      %p205 = pneg %p97
      %p206 = pneg %p121
      %p207 = pneg %p118
      %p208 = pneg %p147
      %p209 = pneg %p144
      %p210 = scmp.lt.s32.totalorder %s16, 1
      %s211 = scalar_select %p210, %s16, 1
      %s212 = smul.addr %s211, 2
      %s213 = smul.addr %s212, 8
      %s214 = scalar_lea.vmem %s5, %s213
      %p215 = scmp.lt.s32.totalorder %s16, 1
      %s216 = scalar_select %p215, %s16, 1
      %s217 = smul.addr %s216, 2
      %s218 = smul.addr %s217, 4
      %s219 = scalar_lea.vmem %s0, %s218
      %p220 = scmp.lt.s32.totalorder %s16, 1
      %s221 = scalar_select %p220, %s16, 1
      %s222 = smul.addr %s221, 2
      %s223 = smul.addr %s222, 8
      %s224 = scalar_lea.vmem %s5, %s223
      %v225 = vlaneseq
      %v226 = vand.u32 %v225, 127
      %v227 = vadd.s32 %v226, 128
      %v228 = vshra.s32 %v226, 4
      %v229 = vshra.s32 %v227, 4
      %v230 = vand.u32 %v226, 15
      %v231 = vand.u32 %v227, 15
      %vm232 = vcmp.ge.s32.totalorder %v228, 1
      %vm233 = vcmp.ge.s32.totalorder %v229, 1
      %vm234 = vcmp.ge.s32.totalorder %v230, 1
      %vm235 = vcmp.ge.s32.totalorder %v231, 1
      %vm236 = vmand %vm232, %vm234
      %vm237 = vmand %vm233, %vm235
      %vm238 = vcmp.le.s32.totalorder %v230, 14
      %vm239 = vcmp.le.s32.totalorder %v231, 14
      %vm240 = vmand %vm232, %vm238
      %vm241 = vmand %vm233, %vm239
      %vm242 = vcmp.le.s32.totalorder %v228, 14
      %vm243 = vcmp.le.s32.totalorder %v229, 14
      %vm244 = vmand %vm242, %vm234
      %vm245 = vmand %vm243, %vm235
      %vm246 = vmand %vm242, %vm238
      %vm247 = vmand %vm243, %vm239
      %v248 = vld [vmem:[%s219] sm:$0xff]
      %v250 = vcombine.high %v248, %v248
      %252 = vrot.lane.b32.xlu0 %v248, 17
      %v253 = vpop.permute.xlu0 %252
      %254 = vrot.lane.b32.xlu0 %v250, 17
      %v255 = vpop.permute.xlu0 %254
      %vm256 = vcmp.lt.s32.totalorder %v226, 17
      %v257 = vsel %vm256, %v253, %v255
      %v258 = vsel %vm256, %v255, %v253
      %v259 = vsel %vm236, 1, 0
      %v260 = vsel %vm237, 1, 0
      %vm261 = vcmp.eq.s32.totalorder %v259, 1
      %vm262 = vcmp.eq.s32.totalorder %v260, 1
      %v263 = vsel %vm261, %v258, 0.0
      %v264 = vsel %vm262, %v257, 0.0
      %v265 = vld [vmem:[%s1] sm:$0xff]
      %266 = vrot.lane.b32.xlu0 %v248, 16
      %v267 = vpop.permute.xlu0 %266
      %268 = vrot.lane.b32.xlu0 %v250, 16
      %v269 = vpop.permute.xlu0 %268
      %vm270 = vcmp.lt.s32.totalorder %v226, 16
      %v271 = vsel %vm270, %v267, %v269
      %v272 = vsel %vm270, %v269, %v267
      %v273 = vsel %vm232, 1, 0
      %v274 = vsel %vm233, 1, 0
      %vm275 = vcmp.eq.s32.totalorder %v273, 1
      %vm276 = vcmp.eq.s32.totalorder %v274, 1
      %v277 = vsel %vm275, %v272, 0.0
      %v278 = vsel %vm276, %v271, 0.0
      %s279 = scalar_lea.vmem %s1, 8
      %v280 = vld [vmem:[%s279] sm:$0xff]
      %vm281 = vcmask 31744
      %v283 = vsel %vm281, %v280, 0
      %vm285 = vcmask 1043456
      %v287 = vsel %vm285, %v277, 0
      %v290 = vsel %vm285, %v278, 0
      %292 = vmatprep.subr.mxu0 %v290
      %293 = vmatpush1.msra.mxu0 %v287
      %294 = vmatprep.subr.mxu0 0.0
      %295 = vmatpush1.msra.mxu0 0.0
      %296 = vmatprep.subr.mxu0 0.0
      %297 = vmatpush1.msra.mxu0 0.0
      %298 = vmatprep.subr.mxu0 0.0
      %299 = vmatpush1.msra.mxu0 0.0
      %300 = vmatprep.subr.mxu0 0.0
      %301 = vmatpush1.msra.mxu0 0.0
      %302 = vmatprep.subr.mxu0 0.0
      %303 = vmatpush1.msra.mxu0 0.0
      %304 = vmatprep.subr.mxu0 0.0
      %305 = vmatpush1.msra.mxu0 0.0
      %306 = vmatprep.subr.mxu0 0.0
      %307 = vmatpush1.msra.mxu0 0.0
      %308 = vmatprep.subr.mxu0 0.0
      %309 = vmatpush1.msra.mxu0 0.0
      %310 = vmatprep.subr.mxu0 0.0
      %311 = vmatpush1.msra.mxu0 0.0
      %312 = vmatprep.subr.mxu0 0.0
      %313 = vmatpush1.msra.mxu0 0.0
      %314 = vmatprep.subr.mxu0 0.0
      %315 = vmatpush1.msra.mxu0 0.0
      %316 = vmatprep.subr.mxu0 0.0
      %317 = vmatpush1.msra.mxu0 0.0
      %318 = vmatprep.subr.mxu0 0.0
      %319 = vmatpush1.msra.mxu0 0.0
      %320 = vmatprep.subr.mxu0 0.0
      %321 = vmatpush1.msra.mxu0 0.0
      %322 = vmatprep.subr.mxu0 0.0
      %323 = vmatpush1.msra.mxu0 0.0
      %324 = vmatprep.subr.mxu0 0.0
      %325 = vmatpush1.msra.mxu0 0.0
      %326 = vmatprep.subr.mxu0 0.0
      %327 = vmatpush1.msra.mxu0 0.0
      %328 = vmatprep.subr.mxu0 0.0
      %329 = vmatpush1.msra.mxu0 0.0
      %330 = vmatprep.subr.mxu0 0.0
      %331 = vmatpush1.msra.mxu0 0.0
      %332 = vmatprep.subr.mxu0 0.0
      %333 = vmatpush1.msra.mxu0 0.0
      %334 = vmatprep.subr.mxu0 0.0
      %335 = vmatpush1.msra.mxu0 0.0
      %336 = vmatprep.subr.mxu0 0.0
      %337 = vmatpush1.msra.mxu0 0.0
      %338 = vmatprep.subr.mxu0 0.0
      %339 = vmatpush1.msra.mxu0 0.0
      %340 = vmatprep.subr.mxu0 0.0
      %341 = vmatpush1.msra.mxu0 0.0
      %342 = vmatprep.subr.mxu0 0.0
      %343 = vmatpush1.msra.mxu0 0.0
      %344 = vmatprep.subr.mxu0 0.0
      %345 = vmatpush1.msra.mxu0 0.0
      %346 = vmatprep.subr.mxu0 0.0
      %347 = vmatpush1.msra.mxu0 0.0
      %348 = vmatprep.subr.mxu0 0.0
      %349 = vmatpush1.msra.mxu0 0.0
      %350 = vmatprep.subr.mxu0 0.0
      %351 = vmatpush1.msra.mxu0 0.0
      %352 = vmatprep.subr.mxu0 0.0
      %353 = vmatpush1.msra.mxu0 0.0
      %354 = vmatprep.subr.mxu0 0.0
      %355 = vmatpush1.msra.mxu0 0.0
      %356 = vmatprep.mubr.f32.mxu0 0.0
      %357 = vmatmul.mubr.f32.gmra.mrb[0].mxu0 %v283
      %v358 = vpop.f32.mrb[0].mxu0
      %v359 = vadd.f32 0.0, %v358
      %v360 = vpop.f32.mrb[0].mxu0
      %v361 = vadd.f32 0.0, %v360
      %362 = vdwg.mxu0
      %v364 = vsel %vm281, %v265, 0
      %v367 = vsel %vm285, %v263, 0
      %v370 = vsel %vm285, %v264, 0
      %372 = vmatprep.subr.mxu0 %v370
      %373 = vmatpush1.msra.mxu0 %v367
      %374 = vmatprep.subr.mxu0 0.0
      %375 = vmatpush1.msra.mxu0 0.0
      %376 = vmatprep.subr.mxu0 0.0
      %377 = vmatpush1.msra.mxu0 0.0
      %378 = vmatprep.subr.mxu0 0.0
      %379 = vmatpush1.msra.mxu0 0.0
      %380 = vmatprep.subr.mxu0 0.0
      %381 = vmatpush1.msra.mxu0 0.0
      %382 = vmatprep.subr.mxu0 0.0
      %383 = vmatpush1.msra.mxu0 0.0
      %384 = vmatprep.subr.mxu0 0.0
      %385 = vmatpush1.msra.mxu0 0.0
      %386 = vmatprep.subr.mxu0 0.0
      %387 = vmatpush1.msra.mxu0 0.0
      %388 = vmatprep.subr.mxu0 0.0
      %389 = vmatpush1.msra.mxu0 0.0
      %390 = vmatprep.subr.mxu0 0.0
      %391 = vmatpush1.msra.mxu0 0.0
      %392 = vmatprep.subr.mxu0 0.0
      %393 = vmatpush1.msra.mxu0 0.0
      %394 = vmatprep.subr.mxu0 0.0
      %395 = vmatpush1.msra.mxu0 0.0
      %396 = vmatprep.subr.mxu0 0.0
      %397 = vmatpush1.msra.mxu0 0.0
      %398 = vmatprep.subr.mxu0 0.0
      %399 = vmatpush1.msra.mxu0 0.0
      %400 = vmatprep.subr.mxu0 0.0
      %401 = vmatpush1.msra.mxu0 0.0
      %402 = vmatprep.subr.mxu0 0.0
      %403 = vmatpush1.msra.mxu0 0.0
      %404 = vmatprep.subr.mxu0 0.0
      %405 = vmatpush1.msra.mxu0 0.0
      %406 = vmatprep.subr.mxu0 0.0
      %407 = vmatpush1.msra.mxu0 0.0
      %408 = vmatprep.subr.mxu0 0.0
      %409 = vmatpush1.msra.mxu0 0.0
      %410 = vmatprep.subr.mxu0 0.0
      %411 = vmatpush1.msra.mxu0 0.0
      %412 = vmatprep.subr.mxu0 0.0
      %413 = vmatpush1.msra.mxu0 0.0
      %414 = vmatprep.subr.mxu0 0.0
      %415 = vmatpush1.msra.mxu0 0.0
      %416 = vmatprep.subr.mxu0 0.0
      %417 = vmatpush1.msra.mxu0 0.0
      %418 = vmatprep.subr.mxu0 0.0
      %419 = vmatpush1.msra.mxu0 0.0
      %420 = vmatprep.subr.mxu0 0.0
      %421 = vmatpush1.msra.mxu0 0.0
      %422 = vmatprep.subr.mxu0 0.0
      %423 = vmatpush1.msra.mxu0 0.0
      %424 = vmatprep.subr.mxu0 0.0
      %425 = vmatpush1.msra.mxu0 0.0
      %426 = vmatprep.subr.mxu0 0.0
      %427 = vmatpush1.msra.mxu0 0.0
      %428 = vmatprep.subr.mxu0 0.0
      %429 = vmatpush1.msra.mxu0 0.0
      %430 = vmatprep.subr.mxu0 0.0
      %431 = vmatpush1.msra.mxu0 0.0
      %432 = vmatprep.subr.mxu0 0.0
      %433 = vmatpush1.msra.mxu0 0.0
      %434 = vmatprep.subr.mxu0 0.0
      %435 = vmatpush1.msra.mxu0 0.0
      %436 = vmatprep.mubr.f32.mxu0 0.0
      %437 = vmatmul.mubr.f32.gmra.mrb[0].mxu0 %v364
      %v438 = vpop.f32.mrb[0].mxu0
      %v439 = vadd.f32 %v359, %v438
      %v440 = vpop.f32.mrb[0].mxu0
      %v441 = vadd.f32 %v361, %v440
      %442 = vdwg.mxu0
      %443 = vrot.lane.b32.xlu0 %v248, 15
      %v444 = vpop.permute.xlu0 %443
      %445 = vrot.lane.b32.xlu0 %v250, 15
      %v446 = vpop.permute.xlu0 %445
      %vm447 = vcmp.lt.s32.totalorder %v226, 15
      %v448 = vsel %vm447, %v444, %v446
      %v449 = vsel %vm447, %v446, %v444
      %v450 = vsel %vm240, 1, 0
      %v451 = vsel %vm241, 1, 0
      %vm452 = vcmp.eq.s32.totalorder %v450, 1
      %vm453 = vcmp.eq.s32.totalorder %v451, 1
      %v454 = vsel %vm452, %v449, 0.0
      %v455 = vsel %vm453, %v448, 0.0
      %s456 = scalar_lea.vmem %s1, 16
      %v457 = vld [vmem:[%s456] sm:$0xff]
      %v459 = vsel %vm281, %v457, 0
      %v462 = vsel %vm285, %v454, 0
      %v465 = vsel %vm285, %v455, 0
      %467 = vmatprep.subr.mxu0 %v465
      %468 = vmatpush1.msra.mxu0 %v462
      %469 = vmatprep.subr.mxu0 0.0
      %470 = vmatpush1.msra.mxu0 0.0
      %471 = vmatprep.subr.mxu0 0.0
      %472 = vmatpush1.msra.mxu0 0.0
      %473 = vmatprep.subr.mxu0 0.0
      %474 = vmatpush1.msra.mxu0 0.0
      %475 = vmatprep.subr.mxu0 0.0
      %476 = vmatpush1.msra.mxu0 0.0
      %477 = vmatprep.subr.mxu0 0.0
      %478 = vmatpush1.msra.mxu0 0.0
      %479 = vmatprep.subr.mxu0 0.0
      %480 = vmatpush1.msra.mxu0 0.0
      %481 = vmatprep.subr.mxu0 0.0
      %482 = vmatpush1.msra.mxu0 0.0
      %483 = vmatprep.subr.mxu0 0.0
      %484 = vmatpush1.msra.mxu0 0.0
      %485 = vmatprep.subr.mxu0 0.0
      %486 = vmatpush1.msra.mxu0 0.0
      %487 = vmatprep.subr.mxu0 0.0
      %488 = vmatpush1.msra.mxu0 0.0
      %489 = vmatprep.subr.mxu0 0.0
      %490 = vmatpush1.msra.mxu0 0.0
      %491 = vmatprep.subr.mxu0 0.0
      %492 = vmatpush1.msra.mxu0 0.0
      %493 = vmatprep.subr.mxu0 0.0
      %494 = vmatpush1.msra.mxu0 0.0
      %495 = vmatprep.subr.mxu0 0.0
      %496 = vmatpush1.msra.mxu0 0.0
      %497 = vmatprep.subr.mxu0 0.0
      %498 = vmatpush1.msra.mxu0 0.0
      %499 = vmatprep.subr.mxu0 0.0
      %500 = vmatpush1.msra.mxu0 0.0
      %501 = vmatprep.subr.mxu0 0.0
      %502 = vmatpush1.msra.mxu0 0.0
      %503 = vmatprep.subr.mxu0 0.0
      %504 = vmatpush1.msra.mxu0 0.0
      %505 = vmatprep.subr.mxu0 0.0
      %506 = vmatpush1.msra.mxu0 0.0
      %507 = vmatprep.subr.mxu0 0.0
      %508 = vmatpush1.msra.mxu0 0.0
      %509 = vmatprep.subr.mxu0 0.0
      %510 = vmatpush1.msra.mxu0 0.0
      %511 = vmatprep.subr.mxu0 0.0
      %512 = vmatpush1.msra.mxu0 0.0
      %513 = vmatprep.subr.mxu0 0.0
      %514 = vmatpush1.msra.mxu0 0.0
      %515 = vmatprep.subr.mxu0 0.0
      %516 = vmatpush1.msra.mxu0 0.0
      %517 = vmatprep.subr.mxu0 0.0
      %518 = vmatpush1.msra.mxu0 0.0
      %519 = vmatprep.subr.mxu0 0.0
      %520 = vmatpush1.msra.mxu0 0.0
      %521 = vmatprep.subr.mxu0 0.0
      %522 = vmatpush1.msra.mxu0 0.0
      %523 = vmatprep.subr.mxu0 0.0
      %524 = vmatpush1.msra.mxu0 0.0
      %525 = vmatprep.subr.mxu0 0.0
      %526 = vmatpush1.msra.mxu0 0.0
      %527 = vmatprep.subr.mxu0 0.0
      %528 = vmatpush1.msra.mxu0 0.0
      %529 = vmatprep.subr.mxu0 0.0
      %530 = vmatpush1.msra.mxu0 0.0
      %531 = vmatprep.mubr.f32.mxu0 0.0
      %532 = vmatmul.mubr.f32.gmra.mrb[0].mxu0 %v459
      %v533 = vpop.f32.mrb[0].mxu0
      %v534 = vadd.f32 0.0, %v533
      %v535 = vpop.f32.mrb[0].mxu0
      %v536 = vadd.f32 0.0, %v535
      %537 = vdwg.mxu0
      %v538 = vadd.f32 %v439, %v534
      %v539 = vadd.f32 %v441, %v536
      %540 = vrot.lane.b32.xlu0 %v248, 1
      %v541 = vpop.permute.xlu0 %540
      %542 = vrot.lane.b32.xlu0 %v250, 1
      %v543 = vpop.permute.xlu0 %542
      %vm544 = vcmp.lt.s32.totalorder %v226, 1
      %v545 = vsel %vm544, %v541, %v543
      %v546 = vsel %vm544, %v543, %v541
      %v547 = vsel %vm234, 1, 0
      %v548 = vsel %vm235, 1, 0
      %vm549 = vcmp.eq.s32.totalorder %v547, 1
      %vm550 = vcmp.eq.s32.totalorder %v548, 1
      %v551 = vsel %vm549, %v546, 0.0
      %v552 = vsel %vm550, %v545, 0.0
      %s553 = scalar_lea.vmem %s1, 24
      %v554 = vld [vmem:[%s553] sm:$0xff]
      %v556 = vsel %vm281, %v554, 0
      %v559 = vsel %vm285, %v551, 0
      %v562 = vsel %vm285, %v552, 0
      %564 = vmatprep.subr.mxu0 %v562
      %565 = vmatpush1.msra.mxu0 %v559
      %566 = vmatprep.subr.mxu0 0.0
      %567 = vmatpush1.msra.mxu0 0.0
      %568 = vmatprep.subr.mxu0 0.0
      %569 = vmatpush1.msra.mxu0 0.0
      %570 = vmatprep.subr.mxu0 0.0
      %571 = vmatpush1.msra.mxu0 0.0
      %572 = vmatprep.subr.mxu0 0.0
      %573 = vmatpush1.msra.mxu0 0.0
      %574 = vmatprep.subr.mxu0 0.0
      %575 = vmatpush1.msra.mxu0 0.0
      %576 = vmatprep.subr.mxu0 0.0
      %577 = vmatpush1.msra.mxu0 0.0
      %578 = vmatprep.subr.mxu0 0.0
      %579 = vmatpush1.msra.mxu0 0.0
      %580 = vmatprep.subr.mxu0 0.0
      %581 = vmatpush1.msra.mxu0 0.0
      %582 = vmatprep.subr.mxu0 0.0
      %583 = vmatpush1.msra.mxu0 0.0
      %584 = vmatprep.subr.mxu0 0.0
      %585 = vmatpush1.msra.mxu0 0.0
      %586 = vmatprep.subr.mxu0 0.0
      %587 = vmatpush1.msra.mxu0 0.0
      %588 = vmatprep.subr.mxu0 0.0
      %589 = vmatpush1.msra.mxu0 0.0
      %590 = vmatprep.subr.mxu0 0.0
      %591 = vmatpush1.msra.mxu0 0.0
      %592 = vmatprep.subr.mxu0 0.0
      %593 = vmatpush1.msra.mxu0 0.0
      %594 = vmatprep.subr.mxu0 0.0
      %595 = vmatpush1.msra.mxu0 0.0
      %596 = vmatprep.subr.mxu0 0.0
      %597 = vmatpush1.msra.mxu0 0.0
      %598 = vmatprep.subr.mxu0 0.0
      %599 = vmatpush1.msra.mxu0 0.0
      %600 = vmatprep.subr.mxu0 0.0
      %601 = vmatpush1.msra.mxu0 0.0
      %602 = vmatprep.subr.mxu0 0.0
      %603 = vmatpush1.msra.mxu0 0.0
      %604 = vmatprep.subr.mxu0 0.0
      %605 = vmatpush1.msra.mxu0 0.0
      %606 = vmatprep.subr.mxu0 0.0
      %607 = vmatpush1.msra.mxu0 0.0
      %608 = vmatprep.subr.mxu0 0.0
      %609 = vmatpush1.msra.mxu0 0.0
      %610 = vmatprep.subr.mxu0 0.0
      %611 = vmatpush1.msra.mxu0 0.0
      %612 = vmatprep.subr.mxu0 0.0
      %613 = vmatpush1.msra.mxu0 0.0
      %614 = vmatprep.subr.mxu0 0.0
      %615 = vmatpush1.msra.mxu0 0.0
      %616 = vmatprep.subr.mxu0 0.0
      %617 = vmatpush1.msra.mxu0 0.0
      %618 = vmatprep.subr.mxu0 0.0
      %619 = vmatpush1.msra.mxu0 0.0
      %620 = vmatprep.subr.mxu0 0.0
      %621 = vmatpush1.msra.mxu0 0.0
      %622 = vmatprep.subr.mxu0 0.0
      %623 = vmatpush1.msra.mxu0 0.0
      %624 = vmatprep.subr.mxu0 0.0
      %625 = vmatpush1.msra.mxu0 0.0
      %626 = vmatprep.subr.mxu0 0.0
      %627 = vmatpush1.msra.mxu0 0.0
      %628 = vmatprep.mubr.f32.mxu0 0.0
      %629 = vmatmul.mubr.f32.gmra.mrb[0].mxu0 %v556
      %v630 = vpop.f32.mrb[0].mxu0
      %v631 = vadd.f32 0.0, %v630
      %v632 = vpop.f32.mrb[0].mxu0
      %v633 = vadd.f32 0.0, %v632
      %634 = vdwg.mxu0
      %v635 = vadd.f32 %v538, %v631
      %v636 = vadd.f32 %v539, %v633
      %s637 = scalar_lea.vmem %s1, 32
      %v638 = vld [vmem:[%s637] sm:$0xff]
      %v640 = vsel %vm281, %v638, 0
      %v642 = vsel %vm285, %v248, 0
      %v644 = vsel %vm285, %v250, 0
      %646 = vmatprep.subr.mxu0 %v644
      %647 = vmatpush1.msra.mxu0 %v642
      %648 = vmatprep.subr.mxu0 0.0
      %649 = vmatpush1.msra.mxu0 0.0
      %650 = vmatprep.subr.mxu0 0.0
      %651 = vmatpush1.msra.mxu0 0.0
      %652 = vmatprep.subr.mxu0 0.0
      %653 = vmatpush1.msra.mxu0 0.0
      %654 = vmatprep.subr.mxu0 0.0
      %655 = vmatpush1.msra.mxu0 0.0
      %656 = vmatprep.subr.mxu0 0.0
      %657 = vmatpush1.msra.mxu0 0.0
      %658 = vmatprep.subr.mxu0 0.0
      %659 = vmatpush1.msra.mxu0 0.0
      %660 = vmatprep.subr.mxu0 0.0
      %661 = vmatpush1.msra.mxu0 0.0
      %662 = vmatprep.subr.mxu0 0.0
      %663 = vmatpush1.msra.mxu0 0.0
      %664 = vmatprep.subr.mxu0 0.0
      %665 = vmatpush1.msra.mxu0 0.0
      %666 = vmatprep.subr.mxu0 0.0
      %667 = vmatpush1.msra.mxu0 0.0
      %668 = vmatprep.subr.mxu0 0.0
      %669 = vmatpush1.msra.mxu0 0.0
      %670 = vmatprep.subr.mxu0 0.0
      %671 = vmatpush1.msra.mxu0 0.0
      %672 = vmatprep.subr.mxu0 0.0
      %673 = vmatpush1.msra.mxu0 0.0
      %674 = vmatprep.subr.mxu0 0.0
      %675 = vmatpush1.msra.mxu0 0.0
      %676 = vmatprep.subr.mxu0 0.0
      %677 = vmatpush1.msra.mxu0 0.0
      %678 = vmatprep.subr.mxu0 0.0
      %679 = vmatpush1.msra.mxu0 0.0
      %680 = vmatprep.subr.mxu0 0.0
      %681 = vmatpush1.msra.mxu0 0.0
      %682 = vmatprep.subr.mxu0 0.0
      %683 = vmatpush1.msra.mxu0 0.0
      %684 = vmatprep.subr.mxu0 0.0
      %685 = vmatpush1.msra.mxu0 0.0
      %686 = vmatprep.subr.mxu0 0.0
      %687 = vmatpush1.msra.mxu0 0.0
      %688 = vmatprep.subr.mxu0 0.0
      %689 = vmatpush1.msra.mxu0 0.0
      %690 = vmatprep.subr.mxu0 0.0
      %691 = vmatpush1.msra.mxu0 0.0
      %692 = vmatprep.subr.mxu0 0.0
      %693 = vmatpush1.msra.mxu0 0.0
      %694 = vmatprep.subr.mxu0 0.0
      %695 = vmatpush1.msra.mxu0 0.0
      %696 = vmatprep.subr.mxu0 0.0
      %697 = vmatpush1.msra.mxu0 0.0
      %698 = vmatprep.subr.mxu0 0.0
      %699 = vmatpush1.msra.mxu0 0.0
      %700 = vmatprep.subr.mxu0 0.0
      %701 = vmatpush1.msra.mxu0 0.0
      %702 = vmatprep.subr.mxu0 0.0
      %703 = vmatpush1.msra.mxu0 0.0
      %704 = vmatprep.subr.mxu0 0.0
      %705 = vmatpush1.msra.mxu0 0.0
      %706 = vmatprep.subr.mxu0 0.0
      %707 = vmatpush1.msra.mxu0 0.0
      %708 = vmatprep.subr.mxu0 0.0
      %709 = vmatpush1.msra.mxu0 0.0
      %710 = vmatprep.mubr.f32.mxu0 0.0
      %711 = vmatmul.mubr.f32.gmra.mrb[0].mxu0 %v640
      %v712 = vpop.f32.mrb[0].mxu0
      %v713 = vadd.f32 0.0, %v712
      %v714 = vpop.f32.mrb[0].mxu0
      %v715 = vadd.f32 0.0, %v714
      %716 = vdwg.mxu0
      %v717 = vadd.f32 %v635, %v713
      %v718 = vadd.f32 %v636, %v715
      %719 = vrot.lane.b32.xlu0 %v248, 127
      %v720 = vpop.permute.xlu0 %719
      %721 = vrot.lane.b32.xlu0 %v250, 127
      %v722 = vpop.permute.xlu0 %721
      %vm723 = vcmp.lt.s32.totalorder %v226, 127
      %v724 = vsel %vm723, %v720, %v722
      %v725 = vsel %vm723, %v722, %v720
      %v726 = vsel %vm238, 1, 0
      %v727 = vsel %vm239, 1, 0
      %vm728 = vcmp.eq.s32.totalorder %v726, 1
      %vm729 = vcmp.eq.s32.totalorder %v727, 1
      %v730 = vsel %vm728, %v724, 0.0
      %v731 = vsel %vm729, %v725, 0.0
      %s732 = scalar_lea.vmem %s1, 40
      %v733 = vld [vmem:[%s732] sm:$0xff]
      %v735 = vsel %vm281, %v733, 0
      %v738 = vsel %vm285, %v730, 0
      %v741 = vsel %vm285, %v731, 0
      %743 = vmatprep.subr.mxu0 %v741
      %744 = vmatpush1.msra.mxu0 %v738
      %745 = vmatprep.subr.mxu0 0.0
      %746 = vmatpush1.msra.mxu0 0.0
      %747 = vmatprep.subr.mxu0 0.0
      %748 = vmatpush1.msra.mxu0 0.0
      %749 = vmatprep.subr.mxu0 0.0
      %750 = vmatpush1.msra.mxu0 0.0
      %751 = vmatprep.subr.mxu0 0.0
      %752 = vmatpush1.msra.mxu0 0.0
      %753 = vmatprep.subr.mxu0 0.0
      %754 = vmatpush1.msra.mxu0 0.0
      %755 = vmatprep.subr.mxu0 0.0
      %756 = vmatpush1.msra.mxu0 0.0
      %757 = vmatprep.subr.mxu0 0.0
      %758 = vmatpush1.msra.mxu0 0.0
      %759 = vmatprep.subr.mxu0 0.0
      %760 = vmatpush1.msra.mxu0 0.0
      %761 = vmatprep.subr.mxu0 0.0
      %762 = vmatpush1.msra.mxu0 0.0
      %763 = vmatprep.subr.mxu0 0.0
      %764 = vmatpush1.msra.mxu0 0.0
      %765 = vmatprep.subr.mxu0 0.0
      %766 = vmatpush1.msra.mxu0 0.0
      %767 = vmatprep.subr.mxu0 0.0
      %768 = vmatpush1.msra.mxu0 0.0
      %769 = vmatprep.subr.mxu0 0.0
      %770 = vmatpush1.msra.mxu0 0.0
      %771 = vmatprep.subr.mxu0 0.0
      %772 = vmatpush1.msra.mxu0 0.0
      %773 = vmatprep.subr.mxu0 0.0
      %774 = vmatpush1.msra.mxu0 0.0
      %775 = vmatprep.subr.mxu0 0.0
      %776 = vmatpush1.msra.mxu0 0.0
      %777 = vmatprep.subr.mxu0 0.0
      %778 = vmatpush1.msra.mxu0 0.0
      %779 = vmatprep.subr.mxu0 0.0
      %780 = vmatpush1.msra.mxu0 0.0
      %781 = vmatprep.subr.mxu0 0.0
      %782 = vmatpush1.msra.mxu0 0.0
      %783 = vmatprep.subr.mxu0 0.0
      %784 = vmatpush1.msra.mxu0 0.0
      %785 = vmatprep.subr.mxu0 0.0
      %786 = vmatpush1.msra.mxu0 0.0
      %787 = vmatprep.subr.mxu0 0.0
      %788 = vmatpush1.msra.mxu0 0.0
      %789 = vmatprep.subr.mxu0 0.0
      %790 = vmatpush1.msra.mxu0 0.0
      %791 = vmatprep.subr.mxu0 0.0
      %792 = vmatpush1.msra.mxu0 0.0
      %793 = vmatprep.subr.mxu0 0.0
      %794 = vmatpush1.msra.mxu0 0.0
      %795 = vmatprep.subr.mxu0 0.0
      %796 = vmatpush1.msra.mxu0 0.0
      %797 = vmatprep.subr.mxu0 0.0
      %798 = vmatpush1.msra.mxu0 0.0
      %799 = vmatprep.subr.mxu0 0.0
      %800 = vmatpush1.msra.mxu0 0.0
      %801 = vmatprep.subr.mxu0 0.0
      %802 = vmatpush1.msra.mxu0 0.0
      %803 = vmatprep.subr.mxu0 0.0
      %804 = vmatpush1.msra.mxu0 0.0
      %805 = vmatprep.subr.mxu0 0.0
      %806 = vmatpush1.msra.mxu0 0.0
      %807 = vmatprep.mubr.f32.mxu0 0.0
      %808 = vmatmul.mubr.f32.gmra.mrb[0].mxu0 %v735
      %v809 = vpop.f32.mrb[0].mxu0
      %v810 = vadd.f32 0.0, %v809
      %v811 = vpop.f32.mrb[0].mxu0
      %v812 = vadd.f32 0.0, %v811
      %813 = vdwg.mxu0
      %v814 = vadd.f32 %v717, %v810
      %v815 = vadd.f32 %v718, %v812
      %816 = vrot.lane.b32.xlu0 %v248, 113
      %v817 = vpop.permute.xlu0 %816
      %818 = vrot.lane.b32.xlu0 %v250, 113
      %v819 = vpop.permute.xlu0 %818
      %vm820 = vcmp.lt.s32.totalorder %v226, 113
      %v821 = vsel %vm820, %v817, %v819
      %v822 = vsel %vm820, %v819, %v817
      %v823 = vsel %vm244, 1, 0
      %v824 = vsel %vm245, 1, 0
      %vm825 = vcmp.eq.s32.totalorder %v823, 1
      %vm826 = vcmp.eq.s32.totalorder %v824, 1
      %v827 = vsel %vm825, %v821, 0.0
      %v828 = vsel %vm826, %v822, 0.0
      %s829 = scalar_lea.vmem %s1, 48
      %v830 = vld [vmem:[%s829] sm:$0xff]
      %v832 = vsel %vm281, %v830, 0
      %v835 = vsel %vm285, %v827, 0
      %v838 = vsel %vm285, %v828, 0
      %840 = vmatprep.subr.mxu0 %v838
      %841 = vmatpush1.msra.mxu0 %v835
      %842 = vmatprep.subr.mxu0 0.0
      %843 = vmatpush1.msra.mxu0 0.0
      %844 = vmatprep.subr.mxu0 0.0
      %845 = vmatpush1.msra.mxu0 0.0
      %846 = vmatprep.subr.mxu0 0.0
      %847 = vmatpush1.msra.mxu0 0.0
      %848 = vmatprep.subr.mxu0 0.0
      %849 = vmatpush1.msra.mxu0 0.0
      %850 = vmatprep.subr.mxu0 0.0
      %851 = vmatpush1.msra.mxu0 0.0
      %852 = vmatprep.subr.mxu0 0.0
      %853 = vmatpush1.msra.mxu0 0.0
      %854 = vmatprep.subr.mxu0 0.0
      %855 = vmatpush1.msra.mxu0 0.0
      %856 = vmatprep.subr.mxu0 0.0
      %857 = vmatpush1.msra.mxu0 0.0
      %858 = vmatprep.subr.mxu0 0.0
      %859 = vmatpush1.msra.mxu0 0.0
      %860 = vmatprep.subr.mxu0 0.0
      %861 = vmatpush1.msra.mxu0 0.0
      %862 = vmatprep.subr.mxu0 0.0
      %863 = vmatpush1.msra.mxu0 0.0
      %864 = vmatprep.subr.mxu0 0.0
      %865 = vmatpush1.msra.mxu0 0.0
      %866 = vmatprep.subr.mxu0 0.0
      %867 = vmatpush1.msra.mxu0 0.0
      %868 = vmatprep.subr.mxu0 0.0
      %869 = vmatpush1.msra.mxu0 0.0
      %870 = vmatprep.subr.mxu0 0.0
      %871 = vmatpush1.msra.mxu0 0.0
      %872 = vmatprep.subr.mxu0 0.0
      %873 = vmatpush1.msra.mxu0 0.0
      %874 = vmatprep.subr.mxu0 0.0
      %875 = vmatpush1.msra.mxu0 0.0
      %876 = vmatprep.subr.mxu0 0.0
      %877 = vmatpush1.msra.mxu0 0.0
      %878 = vmatprep.subr.mxu0 0.0
      %879 = vmatpush1.msra.mxu0 0.0
      %880 = vmatprep.subr.mxu0 0.0
      %881 = vmatpush1.msra.mxu0 0.0
      %882 = vmatprep.subr.mxu0 0.0
      %883 = vmatpush1.msra.mxu0 0.0
      %884 = vmatprep.subr.mxu0 0.0
      %885 = vmatpush1.msra.mxu0 0.0
      %886 = vmatprep.subr.mxu0 0.0
      %887 = vmatpush1.msra.mxu0 0.0
      %888 = vmatprep.subr.mxu0 0.0
      %889 = vmatpush1.msra.mxu0 0.0
      %890 = vmatprep.subr.mxu0 0.0
      %891 = vmatpush1.msra.mxu0 0.0
      %892 = vmatprep.subr.mxu0 0.0
      %893 = vmatpush1.msra.mxu0 0.0
      %894 = vmatprep.subr.mxu0 0.0
      %895 = vmatpush1.msra.mxu0 0.0
      %896 = vmatprep.subr.mxu0 0.0
      %897 = vmatpush1.msra.mxu0 0.0
      %898 = vmatprep.subr.mxu0 0.0
      %899 = vmatpush1.msra.mxu0 0.0
      %900 = vmatprep.subr.mxu0 0.0
      %901 = vmatpush1.msra.mxu0 0.0
      %902 = vmatprep.subr.mxu0 0.0
      %903 = vmatpush1.msra.mxu0 0.0
      %904 = vmatprep.mubr.f32.mxu0 0.0
      %905 = vmatmul.mubr.f32.gmra.mrb[0].mxu0 %v832
      %v906 = vpop.f32.mrb[0].mxu0
      %v907 = vadd.f32 0.0, %v906
      %v908 = vpop.f32.mrb[0].mxu0
      %v909 = vadd.f32 0.0, %v908
      %910 = vdwg.mxu0
      %v911 = vadd.f32 %v814, %v907
      %v912 = vadd.f32 %v815, %v909
      %913 = vrot.lane.b32.xlu0 %v248, 112
      %v914 = vpop.permute.xlu0 %913
      %915 = vrot.lane.b32.xlu0 %v250, 112
      %v916 = vpop.permute.xlu0 %915
      %vm917 = vcmp.lt.s32.totalorder %v226, 112
      %v918 = vsel %vm917, %v914, %v916
      %v919 = vsel %vm917, %v916, %v914
      %v920 = vsel %vm242, 1, 0
      %v921 = vsel %vm243, 1, 0
      %vm922 = vcmp.eq.s32.totalorder %v920, 1
      %vm923 = vcmp.eq.s32.totalorder %v921, 1
      %v924 = vsel %vm922, %v918, 0.0
      %v925 = vsel %vm923, %v919, 0.0
      %s926 = scalar_lea.vmem %s1, 56
      %v927 = vld [vmem:[%s926] sm:$0xff]
      %v929 = vsel %vm281, %v927, 0
      %v932 = vsel %vm285, %v924, 0
      %v935 = vsel %vm285, %v925, 0
      %937 = vmatprep.subr.mxu0 %v935
      %938 = vmatpush1.msra.mxu0 %v932
      %939 = vmatprep.subr.mxu0 0.0
      %940 = vmatpush1.msra.mxu0 0.0
      %941 = vmatprep.subr.mxu0 0.0
      %942 = vmatpush1.msra.mxu0 0.0
      %943 = vmatprep.subr.mxu0 0.0
      %944 = vmatpush1.msra.mxu0 0.0
      %945 = vmatprep.subr.mxu0 0.0
      %946 = vmatpush1.msra.mxu0 0.0
      %947 = vmatprep.subr.mxu0 0.0
      %948 = vmatpush1.msra.mxu0 0.0
      %949 = vmatprep.subr.mxu0 0.0
      %950 = vmatpush1.msra.mxu0 0.0
      %951 = vmatprep.subr.mxu0 0.0
      %952 = vmatpush1.msra.mxu0 0.0
      %953 = vmatprep.subr.mxu0 0.0
      %954 = vmatpush1.msra.mxu0 0.0
      %955 = vmatprep.subr.mxu0 0.0
      %956 = vmatpush1.msra.mxu0 0.0
      %957 = vmatprep.subr.mxu0 0.0
      %958 = vmatpush1.msra.mxu0 0.0
      %959 = vmatprep.subr.mxu0 0.0
      %960 = vmatpush1.msra.mxu0 0.0
      %961 = vmatprep.subr.mxu0 0.0
      %962 = vmatpush1.msra.mxu0 0.0
      %963 = vmatprep.subr.mxu0 0.0
      %964 = vmatpush1.msra.mxu0 0.0
      %965 = vmatprep.subr.mxu0 0.0
      %966 = vmatpush1.msra.mxu0 0.0
      %967 = vmatprep.subr.mxu0 0.0
      %968 = vmatpush1.msra.mxu0 0.0
      %969 = vmatprep.subr.mxu0 0.0
      %970 = vmatpush1.msra.mxu0 0.0
      %971 = vmatprep.subr.mxu0 0.0
      %972 = vmatpush1.msra.mxu0 0.0
      %973 = vmatprep.subr.mxu0 0.0
      %974 = vmatpush1.msra.mxu0 0.0
      %975 = vmatprep.subr.mxu0 0.0
      %976 = vmatpush1.msra.mxu0 0.0
      %977 = vmatprep.subr.mxu0 0.0
      %978 = vmatpush1.msra.mxu0 0.0
      %979 = vmatprep.subr.mxu0 0.0
      %980 = vmatpush1.msra.mxu0 0.0
      %981 = vmatprep.subr.mxu0 0.0
      %982 = vmatpush1.msra.mxu0 0.0
      %983 = vmatprep.subr.mxu0 0.0
      %984 = vmatpush1.msra.mxu0 0.0
      %985 = vmatprep.subr.mxu0 0.0
      %986 = vmatpush1.msra.mxu0 0.0
      %987 = vmatprep.subr.mxu0 0.0
      %988 = vmatpush1.msra.mxu0 0.0
      %989 = vmatprep.subr.mxu0 0.0
      %990 = vmatpush1.msra.mxu0 0.0
      %991 = vmatprep.subr.mxu0 0.0
      %992 = vmatpush1.msra.mxu0 0.0
      %993 = vmatprep.subr.mxu0 0.0
      %994 = vmatpush1.msra.mxu0 0.0
      %995 = vmatprep.subr.mxu0 0.0
      %996 = vmatpush1.msra.mxu0 0.0
      %997 = vmatprep.subr.mxu0 0.0
      %998 = vmatpush1.msra.mxu0 0.0
      %999 = vmatprep.subr.mxu0 0.0
      %1000 = vmatpush1.msra.mxu0 0.0
      %1001 = vmatprep.mubr.f32.mxu0 0.0
      %1002 = vmatmul.mubr.f32.gmra.mrb[0].mxu0 %v929
      %v1003 = vpop.f32.mrb[0].mxu0
      %v1004 = vadd.f32 0.0, %v1003
      %v1005 = vpop.f32.mrb[0].mxu0
      %v1006 = vadd.f32 0.0, %v1005
      %1007 = vdwg.mxu0
      %v1008 = vadd.f32 %v911, %v1004
      %v1009 = vadd.f32 %v912, %v1006
      %1010 = vrot.lane.b32.xlu0 %v248, 111
      %v1011 = vpop.permute.xlu0 %1010
      %1012 = vrot.lane.b32.xlu0 %v250, 111
      %v1013 = vpop.permute.xlu0 %1012
      %vm1014 = vcmp.lt.s32.totalorder %v226, 111
      %v1015 = vsel %vm1014, %v1011, %v1013
      %v1016 = vsel %vm1014, %v1013, %v1011
      %v1017 = vsel %vm246, 1, 0
      %v1018 = vsel %vm247, 1, 0
      %vm1019 = vcmp.eq.s32.totalorder %v1017, 1
      %vm1020 = vcmp.eq.s32.totalorder %v1018, 1
      %v1021 = vsel %vm1019, %v1015, 0.0
      %v1022 = vsel %vm1020, %v1016, 0.0
      %s1023 = scalar_lea.vmem %s1, 64
      %v1024 = vld [vmem:[%s1023] sm:$0xff]
      %v1026 = vsel %vm281, %v1024, 0
      %v1029 = vsel %vm285, %v1021, 0
      %v1032 = vsel %vm285, %v1022, 0
      %1034 = vmatprep.subr.mxu0 %v1032
      %1035 = vmatpush1.msra.mxu0 %v1029
      %1036 = vmatprep.subr.mxu0 0.0
      %1037 = vmatpush1.msra.mxu0 0.0
      %1038 = vmatprep.subr.mxu0 0.0
      %1039 = vmatpush1.msra.mxu0 0.0
      %1040 = vmatprep.subr.mxu0 0.0
      %1041 = vmatpush1.msra.mxu0 0.0
      %1042 = vmatprep.subr.mxu0 0.0
      %1043 = vmatpush1.msra.mxu0 0.0
      %1044 = vmatprep.subr.mxu0 0.0
      %1045 = vmatpush1.msra.mxu0 0.0
      %1046 = vmatprep.subr.mxu0 0.0
      %1047 = vmatpush1.msra.mxu0 0.0
      %1048 = vmatprep.subr.mxu0 0.0
      %1049 = vmatpush1.msra.mxu0 0.0
      %1050 = vmatprep.subr.mxu0 0.0
      %1051 = vmatpush1.msra.mxu0 0.0
      %1052 = vmatprep.subr.mxu0 0.0
      %1053 = vmatpush1.msra.mxu0 0.0
      %1054 = vmatprep.subr.mxu0 0.0
      %1055 = vmatpush1.msra.mxu0 0.0
      %1056 = vmatprep.subr.mxu0 0.0
      %1057 = vmatpush1.msra.mxu0 0.0
      %1058 = vmatprep.subr.mxu0 0.0
      %1059 = vmatpush1.msra.mxu0 0.0
      %1060 = vmatprep.subr.mxu0 0.0
      %1061 = vmatpush1.msra.mxu0 0.0
      %1062 = vmatprep.subr.mxu0 0.0
      %1063 = vmatpush1.msra.mxu0 0.0
      %1064 = vmatprep.subr.mxu0 0.0
      %1065 = vmatpush1.msra.mxu0 0.0
      %1066 = vmatprep.subr.mxu0 0.0
      %1067 = vmatpush1.msra.mxu0 0.0
      %1068 = vmatprep.subr.mxu0 0.0
      %1069 = vmatpush1.msra.mxu0 0.0
      %1070 = vmatprep.subr.mxu0 0.0
      %1071 = vmatpush1.msra.mxu0 0.0
      %1072 = vmatprep.subr.mxu0 0.0
      %1073 = vmatpush1.msra.mxu0 0.0
      %1074 = vmatprep.subr.mxu0 0.0
      %1075 = vmatpush1.msra.mxu0 0.0
      %1076 = vmatprep.subr.mxu0 0.0
      %1077 = vmatpush1.msra.mxu0 0.0
      %1078 = vmatprep.subr.mxu0 0.0
      %1079 = vmatpush1.msra.mxu0 0.0
      %1080 = vmatprep.subr.mxu0 0.0
      %1081 = vmatpush1.msra.mxu0 0.0
      %1082 = vmatprep.subr.mxu0 0.0
      %1083 = vmatpush1.msra.mxu0 0.0
      %1084 = vmatprep.subr.mxu0 0.0
      %1085 = vmatpush1.msra.mxu0 0.0
      %1086 = vmatprep.subr.mxu0 0.0
      %1087 = vmatpush1.msra.mxu0 0.0
      %1088 = vmatprep.subr.mxu0 0.0
      %1089 = vmatpush1.msra.mxu0 0.0
      %1090 = vmatprep.subr.mxu0 0.0
      %1091 = vmatpush1.msra.mxu0 0.0
      %1092 = vmatprep.subr.mxu0 0.0
      %1093 = vmatpush1.msra.mxu0 0.0
      %1094 = vmatprep.subr.mxu0 0.0
      %1095 = vmatpush1.msra.mxu0 0.0
      %1096 = vmatprep.subr.mxu0 0.0
      %1097 = vmatpush1.msra.mxu0 0.0
      %1098 = vmatprep.mubr.f32.mxu0 0.0
      %1099 = vmatmul.mubr.f32.gmra.mrb[0].mxu0 %v1026
      %v1100 = vpop.f32.mrb[0].mxu0
      %v1101 = vadd.f32 0.0, %v1100
      %v1102 = vpop.f32.mrb[0].mxu0
      %v1103 = vadd.f32 0.0, %v1102
      %1104 = vdwg.mxu0
      %v1105 = vadd.f32 %v1008, %v1101
      %v1106 = vadd.f32 %v1009, %v1103
      %v1107 = vld [vmem:[%s2] sm:$0xff]
      %1109 = vset.pattern.permute.xlu0 0
      %1110 = vperm.xlu0 %1109, %v1107
      %v1111 = vpop.permute.xlu0 %1110
      %v1113 = vadd.f32 %v1105, %v1111
      %v1114 = vadd.f32 %v1106, %v1111
      %v1115 = vmax.f32 %v1113, 0.0
      %v1116 = vmax.f32 %v1114, 0.0
      %1117 = vrot.lane.b32.xlu0 %v1115, 17
      %v1118 = vpop.permute.xlu0 %1117
      %1119 = vrot.lane.b32.xlu0 %v1116, 17
      %v1120 = vpop.permute.xlu0 %1119
      %v1121 = vsel %vm256, %v1118, %v1120
      %v1122 = vsel %vm256, %v1120, %v1118
      %v1123 = vsel %vm261, %v1122, 0.0
      %v1124 = vsel %vm262, %v1121, 0.0
      %v1125 = vld [vmem:[%s3] sm:$0xff]
      %v1126 = vld [vmem:[%s3 + $0x8] sm:$0xff]
      %1127 = vrot.lane.b32.xlu0 %v1115, 16
      %v1128 = vpop.permute.xlu0 %1127
      %1129 = vrot.lane.b32.xlu0 %v1116, 16
      %v1130 = vpop.permute.xlu0 %1129
      %v1131 = vsel %vm270, %v1128, %v1130
      %v1132 = vsel %vm270, %v1130, %v1128
      %v1133 = vsel %vm275, %v1132, 0.0
      %v1134 = vsel %vm276, %v1131, 0.0
      %s1135 = scalar_lea.vmem %s3, 16
      %v1136 = vld [vmem:[%s1135] sm:$0xff]
      %v1137 = vld [vmem:[%s1135 + $0x8] sm:$0xff]
      %vm1138 = vcmask 64512
      %v1140 = vsel %vm1138, %v1136, 0
      %v1143 = vsel %vm1138, %v1137, 0
      %1145 = vmatprep.subr.mxu0 %v1134
      %1146 = vmatpush1.msra.mxu0 %v1133
      %1147 = vmatprep.subr.mxu0 0.0
      %1148 = vmatpush1.msra.mxu0 0.0
      %1149 = vmatprep.subr.mxu0 0.0
      %1150 = vmatpush1.msra.mxu0 0.0
      %1151 = vmatprep.subr.mxu0 0.0
      %1152 = vmatpush1.msra.mxu0 0.0
      %1153 = vmatprep.subr.mxu0 0.0
      %1154 = vmatpush1.msra.mxu0 0.0
      %1155 = vmatprep.subr.mxu0 0.0
      %1156 = vmatpush1.msra.mxu0 0.0
      %1157 = vmatprep.subr.mxu0 0.0
      %1158 = vmatpush1.msra.mxu0 0.0
      %1159 = vmatprep.subr.mxu0 0.0
      %1160 = vmatpush1.msra.mxu0 0.0
      %1161 = vmatprep.subr.mxu0 0.0
      %1162 = vmatpush1.msra.mxu0 0.0
      %1163 = vmatprep.subr.mxu0 0.0
      %1164 = vmatpush1.msra.mxu0 0.0
      %1165 = vmatprep.subr.mxu0 0.0
      %1166 = vmatpush1.msra.mxu0 0.0
      %1167 = vmatprep.subr.mxu0 0.0
      %1168 = vmatpush1.msra.mxu0 0.0
      %1169 = vmatprep.subr.mxu0 0.0
      %1170 = vmatpush1.msra.mxu0 0.0
      %1171 = vmatprep.subr.mxu0 0.0
      %1172 = vmatpush1.msra.mxu0 0.0
      %1173 = vmatprep.subr.mxu0 0.0
      %1174 = vmatpush1.msra.mxu0 0.0
      %1175 = vmatprep.subr.mxu0 0.0
      %1176 = vmatpush1.msra.mxu0 0.0
      %1177 = vmatprep.subr.mxu0 0.0
      %1178 = vmatpush1.msra.mxu0 0.0
      %1179 = vmatprep.subr.mxu0 0.0
      %1180 = vmatpush1.msra.mxu0 0.0
      %1181 = vmatprep.subr.mxu0 0.0
      %1182 = vmatpush1.msra.mxu0 0.0
      %1183 = vmatprep.subr.mxu0 0.0
      %1184 = vmatpush1.msra.mxu0 0.0
      %1185 = vmatprep.subr.mxu0 0.0
      %1186 = vmatpush1.msra.mxu0 0.0
      %1187 = vmatprep.subr.mxu0 0.0
      %1188 = vmatpush1.msra.mxu0 0.0
      %1189 = vmatprep.subr.mxu0 0.0
      %1190 = vmatpush1.msra.mxu0 0.0
      %1191 = vmatprep.subr.mxu0 0.0
      %1192 = vmatpush1.msra.mxu0 0.0
      %1193 = vmatprep.subr.mxu0 0.0
      %1194 = vmatpush1.msra.mxu0 0.0
      %1195 = vmatprep.subr.mxu0 0.0
      %1196 = vmatpush1.msra.mxu0 0.0
      %1197 = vmatprep.subr.mxu0 0.0
      %1198 = vmatpush1.msra.mxu0 0.0
      %1199 = vmatprep.subr.mxu0 0.0
      %1200 = vmatpush1.msra.mxu0 0.0
      %1201 = vmatprep.subr.mxu0 0.0
      %1202 = vmatpush1.msra.mxu0 0.0
      %1203 = vmatprep.subr.mxu0 0.0
      %1204 = vmatpush1.msra.mxu0 0.0
      %1205 = vmatprep.subr.mxu0 0.0
      %1206 = vmatpush1.msra.mxu0 0.0
      %1207 = vmatprep.subr.mxu0 0.0
      %1208 = vmatpush1.msra.mxu0 0.0
      %1209 = vmatprep.mubr.f32.mxu0 0.0
      %1210 = vmatmul.mubr.f32.gmra.mrb[0].mxu0 %v1140
      %v1211 = vpop.f32.mrb[0].mxu0
      %v1212 = vadd.f32 0.0, %v1211
      %v1213 = vpop.f32.mrb[0].mxu0
      %v1214 = vadd.f32 0.0, %v1213
      %1215 = vmatprep.mubr.f32.mxu0 0.0
      %1216 = vmatmul.mubr.f32.gmra.mrb[0].mxu0 %v1143
      %v1217 = vpop.f32.mrb[0].mxu0
      %v1218 = vadd.f32 0.0, %v1217
      %v1219 = vpop.f32.mrb[0].mxu0
      %v1220 = vadd.f32 0.0, %v1219
      %1221 = vdwg.mxu0
      %v1223 = vsel %vm1138, %v1125, 0
      %v1226 = vsel %vm1138, %v1126, 0
      %1228 = vmatprep.subr.mxu0 %v1124
      %1229 = vmatpush1.msra.mxu0 %v1123
      %1230 = vmatprep.subr.mxu0 0.0
      %1231 = vmatpush1.msra.mxu0 0.0
      %1232 = vmatprep.subr.mxu0 0.0
      %1233 = vmatpush1.msra.mxu0 0.0
      %1234 = vmatprep.subr.mxu0 0.0
      %1235 = vmatpush1.msra.mxu0 0.0
      %1236 = vmatprep.subr.mxu0 0.0
      %1237 = vmatpush1.msra.mxu0 0.0
      %1238 = vmatprep.subr.mxu0 0.0
      %1239 = vmatpush1.msra.mxu0 0.0
      %1240 = vmatprep.subr.mxu0 0.0
      %1241 = vmatpush1.msra.mxu0 0.0
      %1242 = vmatprep.subr.mxu0 0.0
      %1243 = vmatpush1.msra.mxu0 0.0
      %1244 = vmatprep.subr.mxu0 0.0
      %1245 = vmatpush1.msra.mxu0 0.0
      %1246 = vmatprep.subr.mxu0 0.0
      %1247 = vmatpush1.msra.mxu0 0.0
      %1248 = vmatprep.subr.mxu0 0.0
      %1249 = vmatpush1.msra.mxu0 0.0
      %1250 = vmatprep.subr.mxu0 0.0
      %1251 = vmatpush1.msra.mxu0 0.0
      %1252 = vmatprep.subr.mxu0 0.0
      %1253 = vmatpush1.msra.mxu0 0.0
      %1254 = vmatprep.subr.mxu0 0.0
      %1255 = vmatpush1.msra.mxu0 0.0
      %1256 = vmatprep.subr.mxu0 0.0
      %1257 = vmatpush1.msra.mxu0 0.0
      %1258 = vmatprep.subr.mxu0 0.0
      %1259 = vmatpush1.msra.mxu0 0.0
      %1260 = vmatprep.subr.mxu0 0.0
      %1261 = vmatpush1.msra.mxu0 0.0
      %1262 = vmatprep.subr.mxu0 0.0
      %1263 = vmatpush1.msra.mxu0 0.0
      %1264 = vmatprep.subr.mxu0 0.0
      %1265 = vmatpush1.msra.mxu0 0.0
      %1266 = vmatprep.subr.mxu0 0.0
      %1267 = vmatpush1.msra.mxu0 0.0
      %1268 = vmatprep.subr.mxu0 0.0
      %1269 = vmatpush1.msra.mxu0 0.0
      %1270 = vmatprep.subr.mxu0 0.0
      %1271 = vmatpush1.msra.mxu0 0.0
      %1272 = vmatprep.subr.mxu0 0.0
      %1273 = vmatpush1.msra.mxu0 0.0
      %1274 = vmatprep.subr.mxu0 0.0
      %1275 = vmatpush1.msra.mxu0 0.0
      %1276 = vmatprep.subr.mxu0 0.0
      %1277 = vmatpush1.msra.mxu0 0.0
      %1278 = vmatprep.subr.mxu0 0.0
      %1279 = vmatpush1.msra.mxu0 0.0
      %1280 = vmatprep.subr.mxu0 0.0
      %1281 = vmatpush1.msra.mxu0 0.0
      %1282 = vmatprep.subr.mxu0 0.0
      %1283 = vmatpush1.msra.mxu0 0.0
      %1284 = vmatprep.subr.mxu0 0.0
      %1285 = vmatpush1.msra.mxu0 0.0
      %1286 = vmatprep.subr.mxu0 0.0
      %1287 = vmatpush1.msra.mxu0 0.0
      %1288 = vmatprep.subr.mxu0 0.0
      %1289 = vmatpush1.msra.mxu0 0.0
      %1290 = vmatprep.subr.mxu0 0.0
      %1291 = vmatpush1.msra.mxu0 0.0
      %1292 = vmatprep.mubr.f32.mxu0 0.0
      %1293 = vmatmul.mubr.f32.gmra.mrb[0].mxu0 %v1223
      %v1294 = vpop.f32.mrb[0].mxu0
      %v1295 = vadd.f32 %v1212, %v1294
      %v1296 = vpop.f32.mrb[0].mxu0
      %v1297 = vadd.f32 %v1214, %v1296
      %1298 = vmatprep.mubr.f32.mxu0 0.0
      %1299 = vmatmul.mubr.f32.gmra.mrb[0].mxu0 %v1226
      %v1300 = vpop.f32.mrb[0].mxu0
      %v1301 = vadd.f32 %v1218, %v1300
      %v1302 = vpop.f32.mrb[0].mxu0
      %v1303 = vadd.f32 %v1220, %v1302
      %1304 = vdwg.mxu0
      %1305 = vrot.lane.b32.xlu0 %v1115, 15
      %v1306 = vpop.permute.xlu0 %1305
      %1307 = vrot.lane.b32.xlu0 %v1116, 15
      %v1308 = vpop.permute.xlu0 %1307
      %v1309 = vsel %vm447, %v1306, %v1308
      %v1310 = vsel %vm447, %v1308, %v1306
      %v1311 = vsel %vm452, %v1310, 0.0
      %v1312 = vsel %vm453, %v1309, 0.0
      %s1313 = scalar_lea.vmem %s3, 32
      %v1314 = vld [vmem:[%s1313] sm:$0xff]
      %v1315 = vld [vmem:[%s1313 + $0x8] sm:$0xff]
      %v1317 = vsel %vm1138, %v1314, 0
      %v1320 = vsel %vm1138, %v1315, 0
      %1322 = vmatprep.subr.mxu0 %v1312
      %1323 = vmatpush1.msra.mxu0 %v1311
      %1324 = vmatprep.subr.mxu0 0.0
      %1325 = vmatpush1.msra.mxu0 0.0
      %1326 = vmatprep.subr.mxu0 0.0
      %1327 = vmatpush1.msra.mxu0 0.0
      %1328 = vmatprep.subr.mxu0 0.0
      %1329 = vmatpush1.msra.mxu0 0.0
      %1330 = vmatprep.subr.mxu0 0.0
      %1331 = vmatpush1.msra.mxu0 0.0
      %1332 = vmatprep.subr.mxu0 0.0
      %1333 = vmatpush1.msra.mxu0 0.0
      %1334 = vmatprep.subr.mxu0 0.0
      %1335 = vmatpush1.msra.mxu0 0.0
      %1336 = vmatprep.subr.mxu0 0.0
      %1337 = vmatpush1.msra.mxu0 0.0
      %1338 = vmatprep.subr.mxu0 0.0
      %1339 = vmatpush1.msra.mxu0 0.0
      %1340 = vmatprep.subr.mxu0 0.0
      %1341 = vmatpush1.msra.mxu0 0.0
      %1342 = vmatprep.subr.mxu0 0.0
      %1343 = vmatpush1.msra.mxu0 0.0
      %1344 = vmatprep.subr.mxu0 0.0
      %1345 = vmatpush1.msra.mxu0 0.0
      %1346 = vmatprep.subr.mxu0 0.0
      %1347 = vmatpush1.msra.mxu0 0.0
      %1348 = vmatprep.subr.mxu0 0.0
      %1349 = vmatpush1.msra.mxu0 0.0
      %1350 = vmatprep.subr.mxu0 0.0
      %1351 = vmatpush1.msra.mxu0 0.0
      %1352 = vmatprep.subr.mxu0 0.0
      %1353 = vmatpush1.msra.mxu0 0.0
      %1354 = vmatprep.subr.mxu0 0.0
      %1355 = vmatpush1.msra.mxu0 0.0
      %1356 = vmatprep.subr.mxu0 0.0
      %1357 = vmatpush1.msra.mxu0 0.0
      %1358 = vmatprep.subr.mxu0 0.0
      %1359 = vmatpush1.msra.mxu0 0.0
      %1360 = vmatprep.subr.mxu0 0.0
      %1361 = vmatpush1.msra.mxu0 0.0
      %1362 = vmatprep.subr.mxu0 0.0
      %1363 = vmatpush1.msra.mxu0 0.0
      %1364 = vmatprep.subr.mxu0 0.0
      %1365 = vmatpush1.msra.mxu0 0.0
      %1366 = vmatprep.subr.mxu0 0.0
      %1367 = vmatpush1.msra.mxu0 0.0
      %1368 = vmatprep.subr.mxu0 0.0
      %1369 = vmatpush1.msra.mxu0 0.0
      %1370 = vmatprep.subr.mxu0 0.0
      %1371 = vmatpush1.msra.mxu0 0.0
      %1372 = vmatprep.subr.mxu0 0.0
      %1373 = vmatpush1.msra.mxu0 0.0
      %1374 = vmatprep.subr.mxu0 0.0
      %1375 = vmatpush1.msra.mxu0 0.0
      %1376 = vmatprep.subr.mxu0 0.0
      %1377 = vmatpush1.msra.mxu0 0.0
      %1378 = vmatprep.subr.mxu0 0.0
      %1379 = vmatpush1.msra.mxu0 0.0
      %1380 = vmatprep.subr.mxu0 0.0
      %1381 = vmatpush1.msra.mxu0 0.0
      %1382 = vmatprep.subr.mxu0 0.0
      %1383 = vmatpush1.msra.mxu0 0.0
      %1384 = vmatprep.subr.mxu0 0.0
      %1385 = vmatpush1.msra.mxu0 0.0
      %1386 = vmatprep.mubr.f32.mxu0 0.0
      %1387 = vmatmul.mubr.f32.gmra.mrb[0].mxu0 %v1317
      %v1388 = vpop.f32.mrb[0].mxu0
      %v1389 = vadd.f32 0.0, %v1388
      %v1390 = vpop.f32.mrb[0].mxu0
      %v1391 = vadd.f32 0.0, %v1390
      %1392 = vmatprep.mubr.f32.mxu0 0.0
      %1393 = vmatmul.mubr.f32.gmra.mrb[0].mxu0 %v1320
      %v1394 = vpop.f32.mrb[0].mxu0
      %v1395 = vadd.f32 0.0, %v1394
      %v1396 = vpop.f32.mrb[0].mxu0
      %v1397 = vadd.f32 0.0, %v1396
      %1398 = vdwg.mxu0
      %v1399 = vadd.f32 %v1295, %v1389
      %v1400 = vadd.f32 %v1297, %v1391
      %v1401 = vadd.f32 %v1301, %v1395
      %v1402 = vadd.f32 %v1303, %v1397
      %1403 = vrot.lane.b32.xlu0 %v1115, 1
      %v1404 = vpop.permute.xlu0 %1403
      %1405 = vrot.lane.b32.xlu0 %v1116, 1
      %v1406 = vpop.permute.xlu0 %1405
      %v1407 = vsel %vm544, %v1404, %v1406
      %v1408 = vsel %vm544, %v1406, %v1404
      %v1409 = vsel %vm549, %v1408, 0.0
      %v1410 = vsel %vm550, %v1407, 0.0
      %s1411 = scalar_lea.vmem %s3, 48
      %v1412 = vld [vmem:[%s1411] sm:$0xff]
      %v1413 = vld [vmem:[%s1411 + $0x8] sm:$0xff]
      %v1415 = vsel %vm1138, %v1412, 0
      %v1418 = vsel %vm1138, %v1413, 0
      %1420 = vmatprep.subr.mxu0 %v1410
      %1421 = vmatpush1.msra.mxu0 %v1409
      %1422 = vmatprep.subr.mxu0 0.0
      %1423 = vmatpush1.msra.mxu0 0.0
      %1424 = vmatprep.subr.mxu0 0.0
      %1425 = vmatpush1.msra.mxu0 0.0
      %1426 = vmatprep.subr.mxu0 0.0
      %1427 = vmatpush1.msra.mxu0 0.0
      %1428 = vmatprep.subr.mxu0 0.0
      %1429 = vmatpush1.msra.mxu0 0.0
      %1430 = vmatprep.subr.mxu0 0.0
      %1431 = vmatpush1.msra.mxu0 0.0
      %1432 = vmatprep.subr.mxu0 0.0
      %1433 = vmatpush1.msra.mxu0 0.0
      %1434 = vmatprep.subr.mxu0 0.0
      %1435 = vmatpush1.msra.mxu0 0.0
      %1436 = vmatprep.subr.mxu0 0.0
      %1437 = vmatpush1.msra.mxu0 0.0
      %1438 = vmatprep.subr.mxu0 0.0
      %1439 = vmatpush1.msra.mxu0 0.0
      %1440 = vmatprep.subr.mxu0 0.0
      %1441 = vmatpush1.msra.mxu0 0.0
      %1442 = vmatprep.subr.mxu0 0.0
      %1443 = vmatpush1.msra.mxu0 0.0
      %1444 = vmatprep.subr.mxu0 0.0
      %1445 = vmatpush1.msra.mxu0 0.0
      %1446 = vmatprep.subr.mxu0 0.0
      %1447 = vmatpush1.msra.mxu0 0.0
      %1448 = vmatprep.subr.mxu0 0.0
      %1449 = vmatpush1.msra.mxu0 0.0
      %1450 = vmatprep.subr.mxu0 0.0
      %1451 = vmatpush1.msra.mxu0 0.0
      %1452 = vmatprep.subr.mxu0 0.0
      %1453 = vmatpush1.msra.mxu0 0.0
      %1454 = vmatprep.subr.mxu0 0.0
      %1455 = vmatpush1.msra.mxu0 0.0
      %1456 = vmatprep.subr.mxu0 0.0
      %1457 = vmatpush1.msra.mxu0 0.0
      %1458 = vmatprep.subr.mxu0 0.0
      %1459 = vmatpush1.msra.mxu0 0.0
      %1460 = vmatprep.subr.mxu0 0.0
      %1461 = vmatpush1.msra.mxu0 0.0
      %1462 = vmatprep.subr.mxu0 0.0
      %1463 = vmatpush1.msra.mxu0 0.0
      %1464 = vmatprep.subr.mxu0 0.0
      %1465 = vmatpush1.msra.mxu0 0.0
      %1466 = vmatprep.subr.mxu0 0.0
      %1467 = vmatpush1.msra.mxu0 0.0
      %1468 = vmatprep.subr.mxu0 0.0
      %1469 = vmatpush1.msra.mxu0 0.0
      %1470 = vmatprep.subr.mxu0 0.0
      %1471 = vmatpush1.msra.mxu0 0.0
      %1472 = vmatprep.subr.mxu0 0.0
      %1473 = vmatpush1.msra.mxu0 0.0
      %1474 = vmatprep.subr.mxu0 0.0
      %1475 = vmatpush1.msra.mxu0 0.0
      %1476 = vmatprep.subr.mxu0 0.0
      %1477 = vmatpush1.msra.mxu0 0.0
      %1478 = vmatprep.subr.mxu0 0.0
      %1479 = vmatpush1.msra.mxu0 0.0
      %1480 = vmatprep.subr.mxu0 0.0
      %1481 = vmatpush1.msra.mxu0 0.0
      %1482 = vmatprep.subr.mxu0 0.0
      %1483 = vmatpush1.msra.mxu0 0.0
      %1484 = vmatprep.mubr.f32.mxu0 0.0
      %1485 = vmatmul.mubr.f32.gmra.mrb[0].mxu0 %v1415
      %v1486 = vpop.f32.mrb[0].mxu0
      %v1487 = vadd.f32 0.0, %v1486
      %v1488 = vpop.f32.mrb[0].mxu0
      %v1489 = vadd.f32 0.0, %v1488
      %1490 = vmatprep.mubr.f32.mxu0 0.0
      %1491 = vmatmul.mubr.f32.gmra.mrb[0].mxu0 %v1418
      %v1492 = vpop.f32.mrb[0].mxu0
      %v1493 = vadd.f32 0.0, %v1492
      %v1494 = vpop.f32.mrb[0].mxu0
      %v1495 = vadd.f32 0.0, %v1494
      %1496 = vdwg.mxu0
      %v1497 = vadd.f32 %v1399, %v1487
      %v1498 = vadd.f32 %v1400, %v1489
      %v1499 = vadd.f32 %v1401, %v1493
      %v1500 = vadd.f32 %v1402, %v1495
      %s1501 = scalar_lea.vmem %s3, 64
      %v1502 = vld [vmem:[%s1501] sm:$0xff]
      %v1503 = vld [vmem:[%s1501 + $0x8] sm:$0xff]
      %v1505 = vsel %vm1138, %v1502, 0
      %v1508 = vsel %vm1138, %v1503, 0
      %1510 = vmatprep.subr.mxu0 %v1116
      %1511 = vmatpush1.msra.mxu0 %v1115
      %1512 = vmatprep.subr.mxu0 0.0
      %1513 = vmatpush1.msra.mxu0 0.0
      %1514 = vmatprep.subr.mxu0 0.0
      %1515 = vmatpush1.msra.mxu0 0.0
      %1516 = vmatprep.subr.mxu0 0.0
      %1517 = vmatpush1.msra.mxu0 0.0
      %1518 = vmatprep.subr.mxu0 0.0
      %1519 = vmatpush1.msra.mxu0 0.0
      %1520 = vmatprep.subr.mxu0 0.0
      %1521 = vmatpush1.msra.mxu0 0.0
      %1522 = vmatprep.subr.mxu0 0.0
      %1523 = vmatpush1.msra.mxu0 0.0
      %1524 = vmatprep.subr.mxu0 0.0
      %1525 = vmatpush1.msra.mxu0 0.0
      %1526 = vmatprep.subr.mxu0 0.0
      %1527 = vmatpush1.msra.mxu0 0.0
      %1528 = vmatprep.subr.mxu0 0.0
      %1529 = vmatpush1.msra.mxu0 0.0
      %1530 = vmatprep.subr.mxu0 0.0
      %1531 = vmatpush1.msra.mxu0 0.0
      %1532 = vmatprep.subr.mxu0 0.0
      %1533 = vmatpush1.msra.mxu0 0.0
      %1534 = vmatprep.subr.mxu0 0.0
      %1535 = vmatpush1.msra.mxu0 0.0
      %1536 = vmatprep.subr.mxu0 0.0
      %1537 = vmatpush1.msra.mxu0 0.0
      %1538 = vmatprep.subr.mxu0 0.0
      %1539 = vmatpush1.msra.mxu0 0.0
      %1540 = vmatprep.subr.mxu0 0.0
      %1541 = vmatpush1.msra.mxu0 0.0
      %1542 = vmatprep.subr.mxu0 0.0
      %1543 = vmatpush1.msra.mxu0 0.0
      %1544 = vmatprep.subr.mxu0 0.0
      %1545 = vmatpush1.msra.mxu0 0.0
      %1546 = vmatprep.subr.mxu0 0.0
      %1547 = vmatpush1.msra.mxu0 0.0
      %1548 = vmatprep.subr.mxu0 0.0
      %1549 = vmatpush1.msra.mxu0 0.0
      %1550 = vmatprep.subr.mxu0 0.0
      %1551 = vmatpush1.msra.mxu0 0.0
      %1552 = vmatprep.subr.mxu0 0.0
      %1553 = vmatpush1.msra.mxu0 0.0
      %1554 = vmatprep.subr.mxu0 0.0
      %1555 = vmatpush1.msra.mxu0 0.0
      %1556 = vmatprep.subr.mxu0 0.0
      %1557 = vmatpush1.msra.mxu0 0.0
      %1558 = vmatprep.subr.mxu0 0.0
      %1559 = vmatpush1.msra.mxu0 0.0
      %1560 = vmatprep.subr.mxu0 0.0
      %1561 = vmatpush1.msra.mxu0 0.0
      %1562 = vmatprep.subr.mxu0 0.0
      %1563 = vmatpush1.msra.mxu0 0.0
      %1564 = vmatprep.subr.mxu0 0.0
      %1565 = vmatpush1.msra.mxu0 0.0
      %1566 = vmatprep.subr.mxu0 0.0
      %1567 = vmatpush1.msra.mxu0 0.0
      %1568 = vmatprep.subr.mxu0 0.0
      %1569 = vmatpush1.msra.mxu0 0.0
      %1570 = vmatprep.subr.mxu0 0.0
      %1571 = vmatpush1.msra.mxu0 0.0
      %1572 = vmatprep.subr.mxu0 0.0
      %1573 = vmatpush1.msra.mxu0 0.0
      %1574 = vmatprep.mubr.f32.mxu0 0.0
      %1575 = vmatmul.mubr.f32.gmra.mrb[0].mxu0 %v1505
      %v1576 = vpop.f32.mrb[0].mxu0
      %v1577 = vadd.f32 0.0, %v1576
      %v1578 = vpop.f32.mrb[0].mxu0
      %v1579 = vadd.f32 0.0, %v1578
      %1580 = vmatprep.mubr.f32.mxu0 0.0
      %1581 = vmatmul.mubr.f32.gmra.mrb[0].mxu0 %v1508
      %v1582 = vpop.f32.mrb[0].mxu0
      %v1583 = vadd.f32 0.0, %v1582
      %v1584 = vpop.f32.mrb[0].mxu0
      %v1585 = vadd.f32 0.0, %v1584
      %1586 = vdwg.mxu0
      %v1587 = vadd.f32 %v1497, %v1577
      %v1588 = vadd.f32 %v1498, %v1579
      %v1589 = vadd.f32 %v1499, %v1583
      %v1590 = vadd.f32 %v1500, %v1585
      %1591 = vrot.lane.b32.xlu0 %v1115, 127
      %v1592 = vpop.permute.xlu0 %1591
      %1593 = vrot.lane.b32.xlu0 %v1116, 127
      %v1594 = vpop.permute.xlu0 %1593
      %v1595 = vsel %vm723, %v1592, %v1594
      %v1596 = vsel %vm723, %v1594, %v1592
      %v1597 = vsel %vm728, %v1595, 0.0
      %v1598 = vsel %vm729, %v1596, 0.0
      %s1599 = scalar_lea.vmem %s3, 80
      %v1600 = vld [vmem:[%s1599] sm:$0xff]
      %v1601 = vld [vmem:[%s1599 + $0x8] sm:$0xff]
      %v1603 = vsel %vm1138, %v1600, 0
      %v1606 = vsel %vm1138, %v1601, 0
      %1608 = vmatprep.subr.mxu0 %v1598
      %1609 = vmatpush1.msra.mxu0 %v1597
      %1610 = vmatprep.subr.mxu0 0.0
      %1611 = vmatpush1.msra.mxu0 0.0
      %1612 = vmatprep.subr.mxu0 0.0
      %1613 = vmatpush1.msra.mxu0 0.0
      %1614 = vmatprep.subr.mxu0 0.0
      %1615 = vmatpush1.msra.mxu0 0.0
      %1616 = vmatprep.subr.mxu0 0.0
      %1617 = vmatpush1.msra.mxu0 0.0
      %1618 = vmatprep.subr.mxu0 0.0
      %1619 = vmatpush1.msra.mxu0 0.0
      %1620 = vmatprep.subr.mxu0 0.0
      %1621 = vmatpush1.msra.mxu0 0.0
      %1622 = vmatprep.subr.mxu0 0.0
      %1623 = vmatpush1.msra.mxu0 0.0
      %1624 = vmatprep.subr.mxu0 0.0
      %1625 = vmatpush1.msra.mxu0 0.0
      %1626 = vmatprep.subr.mxu0 0.0
      %1627 = vmatpush1.msra.mxu0 0.0
      %1628 = vmatprep.subr.mxu0 0.0
      %1629 = vmatpush1.msra.mxu0 0.0
      %1630 = vmatprep.subr.mxu0 0.0
      %1631 = vmatpush1.msra.mxu0 0.0
      %1632 = vmatprep.subr.mxu0 0.0
      %1633 = vmatpush1.msra.mxu0 0.0
      %1634 = vmatprep.subr.mxu0 0.0
      %1635 = vmatpush1.msra.mxu0 0.0
      %1636 = vmatprep.subr.mxu0 0.0
      %1637 = vmatpush1.msra.mxu0 0.0
      %1638 = vmatprep.subr.mxu0 0.0
      %1639 = vmatpush1.msra.mxu0 0.0
      %1640 = vmatprep.subr.mxu0 0.0
      %1641 = vmatpush1.msra.mxu0 0.0
      %1642 = vmatprep.subr.mxu0 0.0
      %1643 = vmatpush1.msra.mxu0 0.0
      %1644 = vmatprep.subr.mxu0 0.0
      %1645 = vmatpush1.msra.mxu0 0.0
      %1646 = vmatprep.subr.mxu0 0.0
      %1647 = vmatpush1.msra.mxu0 0.0
      %1648 = vmatprep.subr.mxu0 0.0
      %1649 = vmatpush1.msra.mxu0 0.0
      %1650 = vmatprep.subr.mxu0 0.0
      %1651 = vmatpush1.msra.mxu0 0.0
      %1652 = vmatprep.subr.mxu0 0.0
      %1653 = vmatpush1.msra.mxu0 0.0
      %1654 = vmatprep.subr.mxu0 0.0
      %1655 = vmatpush1.msra.mxu0 0.0
      %1656 = vmatprep.subr.mxu0 0.0
      %1657 = vmatpush1.msra.mxu0 0.0
      %1658 = vmatprep.subr.mxu0 0.0
      %1659 = vmatpush1.msra.mxu0 0.0
      %1660 = vmatprep.subr.mxu0 0.0
      %1661 = vmatpush1.msra.mxu0 0.0
      %1662 = vmatprep.subr.mxu0 0.0
      %1663 = vmatpush1.msra.mxu0 0.0
      %1664 = vmatprep.subr.mxu0 0.0
      %1665 = vmatpush1.msra.mxu0 0.0
      %1666 = vmatprep.subr.mxu0 0.0
      %1667 = vmatpush1.msra.mxu0 0.0
      %1668 = vmatprep.subr.mxu0 0.0
      %1669 = vmatpush1.msra.mxu0 0.0
      %1670 = vmatprep.subr.mxu0 0.0
      %1671 = vmatpush1.msra.mxu0 0.0
      %1672 = vmatprep.mubr.f32.mxu0 0.0
      %1673 = vmatmul.mubr.f32.gmra.mrb[0].mxu0 %v1603
      %v1674 = vpop.f32.mrb[0].mxu0
      %v1675 = vadd.f32 0.0, %v1674
      %v1676 = vpop.f32.mrb[0].mxu0
      %v1677 = vadd.f32 0.0, %v1676
      %1678 = vmatprep.mubr.f32.mxu0 0.0
      %1679 = vmatmul.mubr.f32.gmra.mrb[0].mxu0 %v1606
      %v1680 = vpop.f32.mrb[0].mxu0
      %v1681 = vadd.f32 0.0, %v1680
      %v1682 = vpop.f32.mrb[0].mxu0
      %v1683 = vadd.f32 0.0, %v1682
      %1684 = vdwg.mxu0
      %v1685 = vadd.f32 %v1587, %v1675
      %v1686 = vadd.f32 %v1588, %v1677
      %v1687 = vadd.f32 %v1589, %v1681
      %v1688 = vadd.f32 %v1590, %v1683
      %1689 = vrot.lane.b32.xlu0 %v1115, 113
      %v1690 = vpop.permute.xlu0 %1689
      %1691 = vrot.lane.b32.xlu0 %v1116, 113
      %v1692 = vpop.permute.xlu0 %1691
      %v1693 = vsel %vm820, %v1690, %v1692
      %v1694 = vsel %vm820, %v1692, %v1690
      %v1695 = vsel %vm825, %v1693, 0.0
      %v1696 = vsel %vm826, %v1694, 0.0
      %s1697 = scalar_lea.vmem %s3, 96
      %v1698 = vld [vmem:[%s1697] sm:$0xff]
      %v1699 = vld [vmem:[%s1697 + $0x8] sm:$0xff]
      %v1701 = vsel %vm1138, %v1698, 0
      %v1704 = vsel %vm1138, %v1699, 0
      %1706 = vmatprep.subr.mxu0 %v1696
      %1707 = vmatpush1.msra.mxu0 %v1695
      %1708 = vmatprep.subr.mxu0 0.0
      %1709 = vmatpush1.msra.mxu0 0.0
      %1710 = vmatprep.subr.mxu0 0.0
      %1711 = vmatpush1.msra.mxu0 0.0
      %1712 = vmatprep.subr.mxu0 0.0
      %1713 = vmatpush1.msra.mxu0 0.0
      %1714 = vmatprep.subr.mxu0 0.0
      %1715 = vmatpush1.msra.mxu0 0.0
      %1716 = vmatprep.subr.mxu0 0.0
      %1717 = vmatpush1.msra.mxu0 0.0
      %1718 = vmatprep.subr.mxu0 0.0
      %1719 = vmatpush1.msra.mxu0 0.0
      %1720 = vmatprep.subr.mxu0 0.0
      %1721 = vmatpush1.msra.mxu0 0.0
      %1722 = vmatprep.subr.mxu0 0.0
      %1723 = vmatpush1.msra.mxu0 0.0
      %1724 = vmatprep.subr.mxu0 0.0
      %1725 = vmatpush1.msra.mxu0 0.0
      %1726 = vmatprep.subr.mxu0 0.0
      %1727 = vmatpush1.msra.mxu0 0.0
      %1728 = vmatprep.subr.mxu0 0.0
      %1729 = vmatpush1.msra.mxu0 0.0
      %1730 = vmatprep.subr.mxu0 0.0
      %1731 = vmatpush1.msra.mxu0 0.0
      %1732 = vmatprep.subr.mxu0 0.0
      %1733 = vmatpush1.msra.mxu0 0.0
      %1734 = vmatprep.subr.mxu0 0.0
      %1735 = vmatpush1.msra.mxu0 0.0
      %1736 = vmatprep.subr.mxu0 0.0
      %1737 = vmatpush1.msra.mxu0 0.0
      %1738 = vmatprep.subr.mxu0 0.0
      %1739 = vmatpush1.msra.mxu0 0.0
      %1740 = vmatprep.subr.mxu0 0.0
      %1741 = vmatpush1.msra.mxu0 0.0
      %1742 = vmatprep.subr.mxu0 0.0
      %1743 = vmatpush1.msra.mxu0 0.0
      %1744 = vmatprep.subr.mxu0 0.0
      %1745 = vmatpush1.msra.mxu0 0.0
      %1746 = vmatprep.subr.mxu0 0.0
      %1747 = vmatpush1.msra.mxu0 0.0
      %1748 = vmatprep.subr.mxu0 0.0
      %1749 = vmatpush1.msra.mxu0 0.0
      %1750 = vmatprep.subr.mxu0 0.0
      %1751 = vmatpush1.msra.mxu0 0.0
      %1752 = vmatprep.subr.mxu0 0.0
      %1753 = vmatpush1.msra.mxu0 0.0
      %1754 = vmatprep.subr.mxu0 0.0
      %1755 = vmatpush1.msra.mxu0 0.0
      %1756 = vmatprep.subr.mxu0 0.0
      %1757 = vmatpush1.msra.mxu0 0.0
      %1758 = vmatprep.subr.mxu0 0.0
      %1759 = vmatpush1.msra.mxu0 0.0
      %1760 = vmatprep.subr.mxu0 0.0
      %1761 = vmatpush1.msra.mxu0 0.0
      %1762 = vmatprep.subr.mxu0 0.0
      %1763 = vmatpush1.msra.mxu0 0.0
      %1764 = vmatprep.subr.mxu0 0.0
      %1765 = vmatpush1.msra.mxu0 0.0
      %1766 = vmatprep.subr.mxu0 0.0
      %1767 = vmatpush1.msra.mxu0 0.0
      %1768 = vmatprep.subr.mxu0 0.0
      %1769 = vmatpush1.msra.mxu0 0.0
      %1770 = vmatprep.mubr.f32.mxu0 0.0
      %1771 = vmatmul.mubr.f32.gmra.mrb[0].mxu0 %v1701
      %v1772 = vpop.f32.mrb[0].mxu0
      %v1773 = vadd.f32 0.0, %v1772
      %v1774 = vpop.f32.mrb[0].mxu0
      %v1775 = vadd.f32 0.0, %v1774
      %1776 = vmatprep.mubr.f32.mxu0 0.0
      %1777 = vmatmul.mubr.f32.gmra.mrb[0].mxu0 %v1704
      %v1778 = vpop.f32.mrb[0].mxu0
      %v1779 = vadd.f32 0.0, %v1778
      %v1780 = vpop.f32.mrb[0].mxu0
      %v1781 = vadd.f32 0.0, %v1780
      %1782 = vdwg.mxu0
      %v1783 = vadd.f32 %v1685, %v1773
      %v1784 = vadd.f32 %v1686, %v1775
      %v1785 = vadd.f32 %v1687, %v1779
      %v1786 = vadd.f32 %v1688, %v1781
      %1787 = vrot.lane.b32.xlu0 %v1115, 112
      %v1788 = vpop.permute.xlu0 %1787
      %1789 = vrot.lane.b32.xlu0 %v1116, 112
      %v1790 = vpop.permute.xlu0 %1789
      %v1791 = vsel %vm917, %v1788, %v1790
      %v1792 = vsel %vm917, %v1790, %v1788
      %v1793 = vsel %vm922, %v1791, 0.0
      %v1794 = vsel %vm923, %v1792, 0.0
      %s1795 = scalar_lea.vmem %s3, 112
      %v1796 = vld [vmem:[%s1795] sm:$0xff]
      %v1797 = vld [vmem:[%s1795 + $0x8] sm:$0xff]
      %v1799 = vsel %vm1138, %v1796, 0
      %v1802 = vsel %vm1138, %v1797, 0
      %1804 = vmatprep.subr.mxu0 %v1794
      %1805 = vmatpush1.msra.mxu0 %v1793
      %1806 = vmatprep.subr.mxu0 0.0
      %1807 = vmatpush1.msra.mxu0 0.0
      %1808 = vmatprep.subr.mxu0 0.0
      %1809 = vmatpush1.msra.mxu0 0.0
      %1810 = vmatprep.subr.mxu0 0.0
      %1811 = vmatpush1.msra.mxu0 0.0
      %1812 = vmatprep.subr.mxu0 0.0
      %1813 = vmatpush1.msra.mxu0 0.0
      %1814 = vmatprep.subr.mxu0 0.0
      %1815 = vmatpush1.msra.mxu0 0.0
      %1816 = vmatprep.subr.mxu0 0.0
      %1817 = vmatpush1.msra.mxu0 0.0
      %1818 = vmatprep.subr.mxu0 0.0
      %1819 = vmatpush1.msra.mxu0 0.0
      %1820 = vmatprep.subr.mxu0 0.0
      %1821 = vmatpush1.msra.mxu0 0.0
      %1822 = vmatprep.subr.mxu0 0.0
      %1823 = vmatpush1.msra.mxu0 0.0
      %1824 = vmatprep.subr.mxu0 0.0
      %1825 = vmatpush1.msra.mxu0 0.0
      %1826 = vmatprep.subr.mxu0 0.0
      %1827 = vmatpush1.msra.mxu0 0.0
      %1828 = vmatprep.subr.mxu0 0.0
      %1829 = vmatpush1.msra.mxu0 0.0
      %1830 = vmatprep.subr.mxu0 0.0
      %1831 = vmatpush1.msra.mxu0 0.0
      %1832 = vmatprep.subr.mxu0 0.0
      %1833 = vmatpush1.msra.mxu0 0.0
      %1834 = vmatprep.subr.mxu0 0.0
      %1835 = vmatpush1.msra.mxu0 0.0
      %1836 = vmatprep.subr.mxu0 0.0
      %1837 = vmatpush1.msra.mxu0 0.0
      %1838 = vmatprep.subr.mxu0 0.0
      %1839 = vmatpush1.msra.mxu0 0.0
      %1840 = vmatprep.subr.mxu0 0.0
      %1841 = vmatpush1.msra.mxu0 0.0
      %1842 = vmatprep.subr.mxu0 0.0
      %1843 = vmatpush1.msra.mxu0 0.0
      %1844 = vmatprep.subr.mxu0 0.0
      %1845 = vmatpush1.msra.mxu0 0.0
      %1846 = vmatprep.subr.mxu0 0.0
      %1847 = vmatpush1.msra.mxu0 0.0
      %1848 = vmatprep.subr.mxu0 0.0
      %1849 = vmatpush1.msra.mxu0 0.0
      %1850 = vmatprep.subr.mxu0 0.0
      %1851 = vmatpush1.msra.mxu0 0.0
      %1852 = vmatprep.subr.mxu0 0.0
      %1853 = vmatpush1.msra.mxu0 0.0
      %1854 = vmatprep.subr.mxu0 0.0
      %1855 = vmatpush1.msra.mxu0 0.0
      %1856 = vmatprep.subr.mxu0 0.0
      %1857 = vmatpush1.msra.mxu0 0.0
      %1858 = vmatprep.subr.mxu0 0.0
      %1859 = vmatpush1.msra.mxu0 0.0
      %1860 = vmatprep.subr.mxu0 0.0
      %1861 = vmatpush1.msra.mxu0 0.0
      %1862 = vmatprep.subr.mxu0 0.0
      %1863 = vmatpush1.msra.mxu0 0.0
      %1864 = vmatprep.subr.mxu0 0.0
      %1865 = vmatpush1.msra.mxu0 0.0
      %1866 = vmatprep.subr.mxu0 0.0
      %1867 = vmatpush1.msra.mxu0 0.0
      %1868 = vmatprep.mubr.f32.mxu0 0.0
      %1869 = vmatmul.mubr.f32.gmra.mrb[0].mxu0 %v1799
      %v1870 = vpop.f32.mrb[0].mxu0
      %v1871 = vadd.f32 0.0, %v1870
      %v1872 = vpop.f32.mrb[0].mxu0
      %v1873 = vadd.f32 0.0, %v1872
      %1874 = vmatprep.mubr.f32.mxu0 0.0
      %1875 = vmatmul.mubr.f32.gmra.mrb[0].mxu0 %v1802
      %v1876 = vpop.f32.mrb[0].mxu0
      %v1877 = vadd.f32 0.0, %v1876
      %v1878 = vpop.f32.mrb[0].mxu0
      %v1879 = vadd.f32 0.0, %v1878
      %1880 = vdwg.mxu0
      %v1881 = vadd.f32 %v1783, %v1871
      %v1882 = vadd.f32 %v1784, %v1873
      %v1883 = vadd.f32 %v1785, %v1877
      %v1884 = vadd.f32 %v1786, %v1879
      %1885 = vrot.lane.b32.xlu0 %v1115, 111
      %v1886 = vpop.permute.xlu0 %1885
      %1887 = vrot.lane.b32.xlu0 %v1116, 111
      %v1888 = vpop.permute.xlu0 %1887
      %v1889 = vsel %vm1014, %v1886, %v1888
      %v1890 = vsel %vm1014, %v1888, %v1886
      %v1891 = vsel %vm1019, %v1889, 0.0
      %v1892 = vsel %vm1020, %v1890, 0.0
      %s1893 = scalar_lea.vmem %s3, 128
      %v1894 = vld [vmem:[%s1893] sm:$0xff]
      %v1895 = vld [vmem:[%s1893 + $0x8] sm:$0xff]
      %v1897 = vsel %vm1138, %v1894, 0
      %v1900 = vsel %vm1138, %v1895, 0
      %1902 = vmatprep.subr.mxu0 %v1892
      %1903 = vmatpush1.msra.mxu0 %v1891
      %1904 = vmatprep.subr.mxu0 0.0
      %1905 = vmatpush1.msra.mxu0 0.0
      %1906 = vmatprep.subr.mxu0 0.0
      %1907 = vmatpush1.msra.mxu0 0.0
      %1908 = vmatprep.subr.mxu0 0.0
      %1909 = vmatpush1.msra.mxu0 0.0
      %1910 = vmatprep.subr.mxu0 0.0
      %1911 = vmatpush1.msra.mxu0 0.0
      %1912 = vmatprep.subr.mxu0 0.0
      %1913 = vmatpush1.msra.mxu0 0.0
      %1914 = vmatprep.subr.mxu0 0.0
      %1915 = vmatpush1.msra.mxu0 0.0
      %1916 = vmatprep.subr.mxu0 0.0
      %1917 = vmatpush1.msra.mxu0 0.0
      %1918 = vmatprep.subr.mxu0 0.0
      %1919 = vmatpush1.msra.mxu0 0.0
      %1920 = vmatprep.subr.mxu0 0.0
      %1921 = vmatpush1.msra.mxu0 0.0
      %1922 = vmatprep.subr.mxu0 0.0
      %1923 = vmatpush1.msra.mxu0 0.0
      %1924 = vmatprep.subr.mxu0 0.0
      %1925 = vmatpush1.msra.mxu0 0.0
      %1926 = vmatprep.subr.mxu0 0.0
      %1927 = vmatpush1.msra.mxu0 0.0
      %1928 = vmatprep.subr.mxu0 0.0
      %1929 = vmatpush1.msra.mxu0 0.0
      %1930 = vmatprep.subr.mxu0 0.0
      %1931 = vmatpush1.msra.mxu0 0.0
      %1932 = vmatprep.subr.mxu0 0.0
      %1933 = vmatpush1.msra.mxu0 0.0
      %1934 = vmatprep.subr.mxu0 0.0
      %1935 = vmatpush1.msra.mxu0 0.0
      %1936 = vmatprep.subr.mxu0 0.0
      %1937 = vmatpush1.msra.mxu0 0.0
      %1938 = vmatprep.subr.mxu0 0.0
      %1939 = vmatpush1.msra.mxu0 0.0
      %1940 = vmatprep.subr.mxu0 0.0
      %1941 = vmatpush1.msra.mxu0 0.0
      %1942 = vmatprep.subr.mxu0 0.0
      %1943 = vmatpush1.msra.mxu0 0.0
      %1944 = vmatprep.subr.mxu0 0.0
      %1945 = vmatpush1.msra.mxu0 0.0
      %1946 = vmatprep.subr.mxu0 0.0
      %1947 = vmatpush1.msra.mxu0 0.0
      %1948 = vmatprep.subr.mxu0 0.0
      %1949 = vmatpush1.msra.mxu0 0.0
      %1950 = vmatprep.subr.mxu0 0.0
      %1951 = vmatpush1.msra.mxu0 0.0
      %1952 = vmatprep.subr.mxu0 0.0
      %1953 = vmatpush1.msra.mxu0 0.0
      %1954 = vmatprep.subr.mxu0 0.0
      %1955 = vmatpush1.msra.mxu0 0.0
      %1956 = vmatprep.subr.mxu0 0.0
      %1957 = vmatpush1.msra.mxu0 0.0
      %1958 = vmatprep.subr.mxu0 0.0
      %1959 = vmatpush1.msra.mxu0 0.0
      %1960 = vmatprep.subr.mxu0 0.0
      %1961 = vmatpush1.msra.mxu0 0.0
      %1962 = vmatprep.subr.mxu0 0.0
      %1963 = vmatpush1.msra.mxu0 0.0
      %1964 = vmatprep.subr.mxu0 0.0
      %1965 = vmatpush1.msra.mxu0 0.0
      %1966 = vmatprep.mubr.f32.mxu0 0.0
      %1967 = vmatmul.mubr.f32.gmra.mrb[0].mxu0 %v1897
      %v1968 = vpop.f32.mrb[0].mxu0
      %v1969 = vadd.f32 0.0, %v1968
      %v1970 = vpop.f32.mrb[0].mxu0
      %v1971 = vadd.f32 0.0, %v1970
      %1972 = vmatprep.mubr.f32.mxu0 0.0
      %1973 = vmatmul.mubr.f32.gmra.mrb[0].mxu0 %v1900
      %v1974 = vpop.f32.mrb[0].mxu0
      %v1975 = vadd.f32 0.0, %v1974
      %v1976 = vpop.f32.mrb[0].mxu0
      %v1977 = vadd.f32 0.0, %v1976
      %1978 = vdwg.mxu0
      %v1979 = vadd.f32 %v1881, %v1969
      %v1980 = vadd.f32 %v1882, %v1971
      %v1981 = vadd.f32 %v1883, %v1975
      %v1982 = vadd.f32 %v1884, %v1977
      %v1983 = vld [vmem:[%s4] sm:$0xff]
      %v1984 = vld [vmem:[%s4 + $0x8] sm:$0xff]
      %1986 = vset.pattern.permute.xlu0 0
      %1987 = vperm.xlu0 %1986, %v1983
      %v1988 = vpop.permute.xlu0 %1987
      %1991 = vset.pattern.permute.xlu0 0
      %1992 = vperm.xlu0 %1991, %v1984
      %v1993 = vpop.permute.xlu0 %1992
      %v1995 = vadd.f32 %v1979, %v1988
      %v1996 = vadd.f32 %v1980, %v1988
      %v1997 = vadd.f32 %v1981, %v1993
      %v1998 = vadd.f32 %v1982, %v1993
      %v1999 = vmax.f32 %v1995, 0.0
      %v2000 = vmax.f32 %v1996, 0.0
      %v2001 = vmax.f32 %v1997, 0.0
      %v2002 = vmax.f32 %v1998, 0.0
      %v2003 = vadd.f32 %v1999, %v2000
      %2004 = vadd.xlane.f32.xlu0 %v2003
      %v2005 = vpop.xlane.xlu0 %2004
      %v2006 = vadd.f32 %v2001, %v2002
      %2007 = vadd.xlane.f32.xlu0 %v2006
      %v2008 = vpop.xlane.xlu0 %2007
      %v2009 = vrcp.pop 256.0
      %v2010 = vmul.f32 %v2005, %v2009
      %v2011 = vmul.f32 %v2008, %v2009
      %vm2012 = vcmask 7168
      %2013 = vst.msk [vmem:[%s224] sm:$0xff] %vm2012, %v2010
      %2014 = vst.msk [vmem:[%s224 + $0x8] sm:$0xff] %vm2012, %v2011
      %p2015 = scmp.lt.s32.totalorder %s16, 1
      %s2016 = scalar_select %p2015, %s16, 1
      %s2017 = smul.addr %s2016, 2
      %s2018 = smul.addr %s2017, 8
      %s2019 = scalar_lea.vmem %s5, %s2018
      // Predicated region
      $region41: #{feature_extractor_forward.1} parent=39 // pred_check
        %p2020 = pneg %p144
      $region42: #{feature_extractor_forward.1} parent=39 // pred_check_branch
        %2022 = sbr.rel (%p2020) target = $region44
      $region43: #{feature_extractor_forward.1} parent=39 // pred_region
        _
      $region44: #{feature_extractor_forward.1} parent=39 // pred_fallthru
        _
    $region40: #{feature_extractor_forward.1} parent=5 // pred_fallthru
      _
    %p2023 = scmp.le.s32.totalorder 2, %s11
    // Predicated region
    $region45: #{feature_extractor_forward.1} parent=5 // pred_check
      %p2024 = pneg %p2023
    $region46: #{feature_extractor_forward.1} parent=5 // pred_check_branch
      %2026 = sbr.rel (%p2024) target = $region48
    $region47: #{feature_extractor_forward.1} parent=5 // pred_region
      %s2027 = ssub.s32 %s11, 2
      // Predicated region
      $region49: #{feature_extractor_forward.1} parent=47 // pred_check
        %p2028 = pneg %p150
      $region50: #{feature_extractor_forward.1} parent=47 // pred_check_branch
        %2030 = sbr.rel (%p2028) target = $region52
      $region51: #{feature_extractor_forward.1} parent=47 // pred_region
        %p2031 = scmp.lt.s32.totalorder %s17, 1
        %s2032 = scalar_select %p2031, %s17, 1
        %s2033 = smul.addr %s2032, 2
        %s2034 = smul.addr %s2033, 8
        %s2035 = scalar_lea.vmem %s5, %s2034
      $region52: #{feature_extractor_forward.1} parent=47 // pred_fallthru
        _
    $region48: #{feature_extractor_forward.1} parent=5 // pred_fallthru
      _
  $region6: #{feature_extractor_forward.1} parent=0 // loop_footer
    %s15 = sadd.s32 1, %s11
  $region7: #{feature_extractor_forward.1} parent=0 // loop_footer_branch
    %10 = sbr.rel target = $region3
  $region8: #{feature_extractor_forward.1} parent=0 // loop_exit
    _

</llo_original>
